<compile_context>
chip_gen: v6e
topology: v6e:2x2x1
jax: 0.10.0
libtpu: 0.0.40
codegen_flags: <defaults>
</compile_context>

<pallas_src>
import functools

import jax
import jax.numpy as jnp
from jax.experimental import pallas as pl
from jax.experimental.pallas import tpu as pltpu

# ----------------------------- config (small, consistent with the module) ----
B = 2          # batch
C_IN = 4       # inp_channels
C_OUT = 8      # out_channels (divisible by GroupNorm n_groups=8)
L = 16         # prediction_length
T_DIM = 32     # time_embed_dim
K = 5          # kernel_size (odd -> 'same' padding = K // 2)
N_GROUPS = 8   # GroupNorm groups used inside Conv1dBlock
EPS = 1e-5     # GroupNorm eps (PyTorch default)


# ----------------------------- activations -----------------------------------
def _mish_ref(v):
    # Standard PyTorch Mish: x * tanh(softplus(x)), softplus threshold = 20.
    sp = jnp.where(v > 20.0, v, jnp.log1p(jnp.exp(jnp.minimum(v, 20.0))))
    return v * jnp.tanh(sp)


def _mish_fast(v):
    # tanh(softplus(x)) = ((1+e)^2 - 1) / ((1+e)^2 + 1) with e = exp(x);
    # exact algebraic rewrite -> one transcendental instead of three.
    e = jnp.exp(jnp.minimum(v, 20.0))
    t = (1.0 + e) * (1.0 + e)
    return jnp.where(v > 20.0, v, v * (t - 1.0) / (t + 1.0))


# ----------------------------- GroupNorm --------------------------------------
def _gn(h, gamma, beta, n_groups, eps=EPS):
    # h: [L, C]; gamma/beta: [1, C]
    l, c = h.shape
    cpg = c // n_groups
    if cpg == 1:
        # Each group is exactly one channel: per-channel mean/var over L.
        mu = jnp.mean(h, axis=0, keepdims=True)                        # [1, C]
        var = jnp.mean((h - mu) * (h - mu), axis=0, keepdims=True)     # two-pass
    else:
        # Fallback (not traced at these sizes): per-channel stats, then one tiny
        # matmul against a constant one-hot membership matrix to pool per group.
        m = (jnp.arange(c)[:, None] // cpg ==
             jnp.arange(n_groups)[None, :]).astype(jnp.float32)        # [C, G]
        mu_ch = jnp.mean(h, axis=0, keepdims=True)
        ex2_ch = jnp.mean(h * h, axis=0, keepdims=True)
        mu = jnp.dot(jnp.dot(mu_ch, m, preferred_element_type=jnp.float32) / cpg,
                     m.T, preferred_element_type=jnp.float32)
        ex2 = jnp.dot(jnp.dot(ex2_ch, m, preferred_element_type=jnp.float32) / cpg,
                      m.T, preferred_element_type=jnp.float32)
        var = jnp.maximum(ex2 - mu * mu, 0.0)
    return (h - mu) * jax.lax.rsqrt(var + eps) * gamma + beta


# ----------------------------- Pallas kernel ----------------------------------
def _rtb_kernel(x_ref, xcol_ref, tf_ref, w1_ref, w2_ref, wr_ref, p_ref,
                o_ref, pad_ref, *, n_groups, k):
    # x_ref   : [B, L, Cin]        raw input (for the residual 1x1 conv)
    # xcol_ref: [B, L, K*Cin]      im2col of x (built in the wrapper)
    # tf_ref  : [B, 1, Cout]       hoisted time-MLP output
    # w1_ref  : [K*Cin, Cout]      folded conv-1 weights
    # w2_ref  : [K, Cout, Cout]    per-tap conv-2 weights
    # wr_ref  : [Cin, Cout]        residual 1x1 weights (identity when Cin==Cout)
    # p_ref   : [8, Cout]          packed rows: b1,g1,be1,b2,g2,be2,br,0
    # pad_ref : [L+2P, Cout]       scratch for conv-2 taps (halo rows zeroed once)
    nb, l, _ = x_ref.shape
    pval = k // 2
    c_out = o_ref.shape[2]

    # Zero only the halo rows, once per launch (nothing else ever writes them).
    zrow = jnp.zeros((pval, c_out), jnp.float32)
    pad_ref[0:pval, :] = zrow
    pad_ref[pval + l:pval + l + pval, :] = zrow

    # Packed per-channel parameter rows (each [1, Cout]).
    b1 = p_ref[0:1, :]
    g1 = p_ref[1:2, :]
    be1 = p_ref[2:3, :]
    b2 = p_ref[3:4, :]
    g2 = p_ref[4:5, :]
    be2 = p_ref[5:6, :]
    br = p_ref[6:7, :]

    for bi in range(nb):  # B is tiny and static -> fully unrolled, single launch
        # ---- blocks[0]: Conv1d (single im2col matmul) -> GroupNorm -> Mish ----
        h = jnp.dot(xcol_ref[bi], w1_ref[...],
                    preferred_element_type=jnp.float32) + b1           # [L, Cout]
        h = _mish_fast(_gn(h, g1, be1, n_groups))

        # add time embedding (broadcast over length)
        h = h + tf_ref[bi]

        # ---- blocks[1]: Conv1d (tap loop over padded scratch) -> GN -> Mish ----
        pad_ref[pval:pval + l, :] = h
        acc = jnp.zeros((l, c_out), jnp.float32) + b2
        for tap in range(k):  # K static and small -> unrolled MXU taps
            acc = acc + jnp.dot(pad_ref[tap:tap + l, :], w2_ref[tap],
                                preferred_element_type=jnp.float32)
        h = _mish_fast(_gn(acc, g2, be2, n_groups))

        # ---- residual 1x1 conv (identity weights when Cin == Cout) ----
        res = jnp.dot(x_ref[bi], wr_ref[...],
                      preferred_element_type=jnp.float32) + br
        o_ref[bi] = (h + res).astype(o_ref.dtype)


# ----------------------------- wrapper -----------------------------------------
def residual_temporal_block(x, t, params):
    """x: [B, inp_channels, L] (NCL), t: [B, time_embed_dim] -> [B, out_channels, L]."""
    b, c_in, l = x.shape
    c_out = params["b1"].shape[0]
    k = params["w1"].shape[2]
    pad_w = k // 2

    # --- weight re-layout for the [L, C] kernel convention ---
    # conv1: torch [Cout, Cin, K] -> folded [K*Cin, Cout] (tap-major rows)
    w1f = jnp.transpose(params["w1"], (2, 1, 0)).reshape(k * c_in, c_out).astype(jnp.float32)
    # conv2: torch [Cout, Cout, K] -> per-tap [K, Cout, Cout]
    w2 = jnp.transpose(params["w2"], (2, 1, 0)).astype(jnp.float32)

    if params.get("wr") is not None:
        wr = jnp.transpose(params["wr"][:, :, 0], (1, 0)).astype(jnp.float32)  # [Cin, Cout]
        br = params["br"].astype(jnp.float32)
    else:  # inp_channels == out_channels -> nn.Identity() (exact in f32)
        wr = jnp.eye(c_in, dtype=jnp.float32)
        br = jnp.zeros((c_out,), jnp.float32)

    # --- hoisted time MLP: Mish -> Linear -> [B, 1, Cout] ---
    tfeat = (_mish_ref(t.astype(jnp.float32)) @ params["wt"].T.astype(jnp.float32)
             + params["bt"].astype(jnp.float32))[:, None, :]

    # --- packed per-channel parameter rows: [8, Cout] (one DMA instead of eight) ---
    row = lambda v: jnp.asarray(v, jnp.float32).reshape(1, -1)
    prows = jnp.concatenate(
        [row(params["b1"]), row(params["g1"]), row(params["be1"]),
         row(params["b2"]), row(params["g2"]), row(params["be2"]),
         row(br), jnp.zeros((1, c_out), jnp.float32)], axis=0)

    # --- input re-layout + im2col for conv1 (built by XLA outside the kernel) ---
    x_lc = jnp.transpose(x, (0, 2, 1)).astype(jnp.float32)          # [B, L, Cin]
    xpad = jnp.pad(x_lc, ((0, 0), (pad_w, pad_w), (0, 0)))          # [B, L+2P, Cin]
    xcol = jnp.concatenate([xpad[:, tap:tap + l, :] for tap in range(k)],
                           axis=2)                                  # [B, L, K*Cin]

    def _full(shape):
        nd = len(shape)
        return pl.BlockSpec(shape, lambda: (0,) * nd)

    out = pl.pallas_call(
        functools.partial(_rtb_kernel, n_groups=N_GROUPS, k=k),
        out_shape=jax.ShapeDtypeStruct((b, l, c_out), jnp.float32),
        # no grid: one invocation handles all batches (grid overhead removed)
        in_specs=[
            _full((b, l, c_in)),
            _full((b, l, k * c_in)),
            _full((b, 1, c_out)),
            _full((k * c_in, c_out)),
            _full((k, c_out, c_out)),
            _full((c_in, c_out)),
            _full((8, c_out)),
        ],
        out_specs=_full((b, l, c_out)),
        scratch_shapes=[pltpu.VMEM((l + 2 * pad_w, c_out), jnp.float32)],
    )(x_lc, xcol, tfeat, w1f, w2, wr, prows)

    return jnp.transpose(out, (0, 2, 1))                            # back to [B, Cout, L]


# ----------------------------- pure-JAX reference ------------------------------
def ref_forward(x, t, params):
    def conv1d(h, w, bias):
        out = jax.lax.conv_general_dilated(
            h, w, window_strides=(1,), padding=[(K // 2, K // 2)],
            dimension_numbers=("NCH", "OIH", "NCH"))
        return out + bias[None, :, None]

    def gn(h, gamma, beta):
        bb, c, l = h.shape
        hg = h.reshape(bb, N_GROUPS, (c // N_GROUPS) * l)
        mu = hg.mean(-1, keepdims=True)
        var = ((hg - mu) ** 2).mean(-1, keepdims=True)
        hn = ((hg - mu) / jnp.sqrt(var + EPS)).reshape(bb, c, l)
        return hn * gamma[None, :, None] + beta[None, :, None]

    h = _mish_ref(gn(conv1d(x, params["w1"], params["b1"]), params["g1"], params["be1"]))
    tf = _mish_ref(t) @ params["wt"].T + params["bt"]
    h = h + tf[:, :, None]
    h = _mish_ref(gn(conv1d(h, params["w2"], params["b2"]), params["g2"], params["be2"]))
    if params.get("wr") is not None:
        res = jnp.einsum("oc,bcl->bol", params["wr"][:, :, 0], x) + params["br"][None, :, None]
    else:
        res = x
    return h + res


if __name__ == "__main__":
    key = jax.random.PRNGKey(0)
    ks = jax.random.split(key, 14)
    params = {
        "w1": 0.2 * jax.random.normal(ks[0], (C_OUT, C_IN, K), jnp.float32),
        "b1": 0.1 * jax.random.normal(ks[1], (C_OUT,), jnp.float32),
        "g1": 1.0 + 0.1 * jax.random.normal(ks[2], (C_OUT,), jnp.float32),
        "be1": 0.1 * jax.random.normal(ks[3], (C_OUT,), jnp.float32),
        "w2": 0.2 * jax.random.normal(ks[4], (C_OUT, C_OUT, K), jnp.float32),
        "b2": 0.1 * jax.random.normal(ks[5], (C_OUT,), jnp.float32),
        "g2": 1.0 + 0.1 * jax.random.normal(ks[6], (C_OUT,), jnp.float32),
        "be2": 0.1 * jax.random.normal(ks[7], (C_OUT,), jnp.float32),
        "wt": 0.2 * jax.random.normal(ks[8], (C_OUT, T_DIM), jnp.float32),
        "bt": 0.1 * jax.random.normal(ks[9], (C_OUT,), jnp.float32),
        # inp_channels != out_channels -> residual_conv is a 1x1 Conv1d
        "wr": 0.2 * jax.random.normal(ks[10], (C_OUT, C_IN, 1), jnp.float32),
        "br": 0.1 * jax.random.normal(ks[11], (C_OUT,), jnp.float32),
    }
    x = jax.random.normal(ks[12], (B, C_IN, L), jnp.float32)
    t = jax.random.normal(ks[13], (B, T_DIM), jnp.float32)

    out = jax.block_until_ready(residual_temporal_block(x, t, params))
    ref = jax.block_until_ready(ref_forward(x, t, params))

    assert out.shape == (B, C_OUT, L)
    max_err = float(jnp.max(jnp.abs(out - ref)))
    assert jnp.allclose(out, ref, atol=1e-3, rtol=1e-3), f"max abs err {max_err}"
    print("KERNEL_OK")
</pallas_src>

<mosaic_0001>
module attributes {stable_mosaic.version = 11 : i64} {
  func.func @_rtb_kernel(%arg0: memref<2x16x4xf32, #tpu.memory_space<vmem>>, %arg1: memref<2x16x20xf32, #tpu.memory_space<vmem>>, %arg2: memref<2x1x8xf32, #tpu.memory_space<vmem>>, %arg3: memref<20x8xf32, #tpu.memory_space<vmem>>, %arg4: memref<5x8x8xf32, #tpu.memory_space<vmem>>, %arg5: memref<4x8xf32, #tpu.memory_space<vmem>>, %arg6: memref<8x8xf32, #tpu.memory_space<vmem>>, %arg7: memref<2x16x8xf32, #tpu.memory_space<vmem>>, %arg8: memref<20x8xf32, #tpu.memory_space<vmem>>) attributes {dimension_semantics = [], scalar_prefetch = 0 : i64, scratch_operands = 1 : i64, tpu.core_type = #tpu.core_type<tc>} {
    %cst = arith.constant 0.000000e+00 : f32
    %0 = vector.broadcast %cst : f32 to vector<2x8xf32>
    %c0 = arith.constant 0 : index
    %c0_0 = arith.constant 0 : index
    %1 = vector.load %arg8[%c0, %c0_0] : memref<20x8xf32, #tpu.memory_space<vmem>>, vector<2x8xf32>
    tpu.vector_store %arg8[%c0, %c0_0], %0 {strides = array<i32>} : memref<20x8xf32, #tpu.memory_space<vmem>>, vector<2x8xf32>,
    %c18 = arith.constant 18 : index
    %c0_1 = arith.constant 0 : index
    %2 = vector.load %arg8[%c18, %c0_1] : memref<20x8xf32, #tpu.memory_space<vmem>>, vector<2x8xf32>
    tpu.vector_store %arg8[%c18, %c0_1], %0 {strides = array<i32>} : memref<20x8xf32, #tpu.memory_space<vmem>>, vector<2x8xf32>,
    %c0_2 = arith.constant 0 : index
    %c0_3 = arith.constant 0 : index
    %3 = vector.load %arg6[%c0_2, %c0_3] : memref<8x8xf32, #tpu.memory_space<vmem>>, vector<1x8xf32>
    %c1 = arith.constant 1 : index
    %c0_4 = arith.constant 0 : index
    %4 = vector.load %arg6[%c1, %c0_4] : memref<8x8xf32, #tpu.memory_space<vmem>>, vector<1x8xf32>
    %c2 = arith.constant 2 : index
    %c0_5 = arith.constant 0 : index
    %5 = vector.load %arg6[%c2, %c0_5] : memref<8x8xf32, #tpu.memory_space<vmem>>, vector<1x8xf32>
    %c3 = arith.constant 3 : index
    %c0_6 = arith.constant 0 : index
    %6 = vector.load %arg6[%c3, %c0_6] : memref<8x8xf32, #tpu.memory_space<vmem>>, vector<1x8xf32>
    %c4 = arith.constant 4 : index
    %c0_7 = arith.constant 0 : index
    %7 = vector.load %arg6[%c4, %c0_7] : memref<8x8xf32, #tpu.memory_space<vmem>>, vector<1x8xf32>
    %c5 = arith.constant 5 : index
    %c0_8 = arith.constant 0 : index
    %8 = vector.load %arg6[%c5, %c0_8] : memref<8x8xf32, #tpu.memory_space<vmem>>, vector<1x8xf32>
    %c6 = arith.constant 6 : index
    %c0_9 = arith.constant 0 : index
    %9 = vector.load %arg6[%c6, %c0_9] : memref<8x8xf32, #tpu.memory_space<vmem>>, vector<1x8xf32>
    %c0_10 = arith.constant 0 : index
    %c0_11 = arith.constant 0 : index
    %c0_12 = arith.constant 0 : index
    %10 = vector.load %arg1[%c0_10, %c0_11, %c0_12] : memref<2x16x20xf32, #tpu.memory_space<vmem>>, vector<1x16x20xf32>
    %11 = vector.shape_cast %10 : vector<1x16x20xf32> to vector<16x20xf32>
    %c0_13 = arith.constant 0 : index
    %c0_14 = arith.constant 0 : index
    %12 = vector.load %arg3[%c0_13, %c0_14] : memref<20x8xf32, #tpu.memory_space<vmem>>, vector<20x8xf32>
    %cst_15 = arith.constant dense<0.000000e+00> : vector<16x8xf32>
    %13 = tpu.matmul %11, %12, %cst_15 {dimension_numbers = #tpu.dot_dimension_numbers<[1], [0], [0], [1], [0, 0, 1, 1], [], []>} : vector<16x20xf32>, vector<20x8xf32>, vector<16x8xf32> -> vector<16x8xf32>
    %14 = vector.broadcast %3 : vector<1x8xf32> to vector<16x8xf32>
    %15 = arith.addf %13, %14 : vector<16x8xf32>
    %cst_16 = arith.constant dense<0.000000e+00> : vector<8xf32>
    %16 = vector.multi_reduction <add>, %15, %cst_16 [0] : vector<16x8xf32> to vector<8xf32>
    %17 = vector.shape_cast %16 : vector<8xf32> to vector<1x8xf32>
    %cst_17 = arith.constant 1.600000e+01 : f32
    %18 = vector.broadcast %cst_17 : f32 to vector<1x8xf32>
    %19 = arith.divf %17, %18 : vector<1x8xf32>
    %20 = vector.broadcast %19 : vector<1x8xf32> to vector<16x8xf32>
    %21 = arith.subf %15, %20 : vector<16x8xf32>
    %22 = vector.broadcast %19 : vector<1x8xf32> to vector<16x8xf32>
    %23 = arith.subf %15, %22 : vector<16x8xf32>
    %24 = arith.mulf %21, %23 : vector<16x8xf32>
    %cst_18 = arith.constant dense<0.000000e+00> : vector<8xf32>
    %25 = vector.multi_reduction <add>, %24, %cst_18 [0] : vector<16x8xf32> to vector<8xf32>
    %26 = vector.shape_cast %25 : vector<8xf32> to vector<1x8xf32>
    %cst_19 = arith.constant 1.600000e+01 : f32
    %27 = vector.broadcast %cst_19 : f32 to vector<1x8xf32>
    %28 = arith.divf %26, %27 : vector<1x8xf32>
    %29 = vector.broadcast %19 : vector<1x8xf32> to vector<16x8xf32>
    %30 = arith.subf %15, %29 : vector<16x8xf32>
    %cst_20 = arith.constant 9.99999974E-6 : f32
    %31 = vector.broadcast %cst_20 : f32 to vector<1x8xf32>
    %32 = arith.addf %28, %31 : vector<1x8xf32>
    %33 = math.rsqrt %32 : vector<1x8xf32>
    %34 = vector.broadcast %33 : vector<1x8xf32> to vector<16x8xf32>
    %35 = arith.mulf %30, %34 : vector<16x8xf32>
    %36 = vector.broadcast %4 : vector<1x8xf32> to vector<16x8xf32>
    %37 = arith.mulf %35, %36 : vector<16x8xf32>
    %38 = vector.broadcast %5 : vector<1x8xf32> to vector<16x8xf32>
    %39 = arith.addf %37, %38 : vector<16x8xf32>
    %cst_21 = arith.constant 2.000000e+01 : f32
    %40 = vector.broadcast %cst_21 : f32 to vector<16x8xf32>
    %41 = arith.minimumf %39, %40 : vector<16x8xf32>
    %42 = math.exp %41 : vector<16x8xf32>
    %cst_22 = arith.constant 1.000000e+00 : f32
    %43 = vector.broadcast %cst_22 : f32 to vector<16x8xf32>
    %44 = arith.addf %43, %42 : vector<16x8xf32>
    %cst_23 = arith.constant 1.000000e+00 : f32
    %45 = vector.broadcast %cst_23 : f32 to vector<16x8xf32>
    %46 = arith.addf %45, %42 : vector<16x8xf32>
    %47 = arith.mulf %44, %46 : vector<16x8xf32>
    %cst_24 = arith.constant 2.000000e+01 : f32
    %48 = vector.broadcast %cst_24 : f32 to vector<16x8xf32>
    %49 = arith.cmpf ogt, %39, %48 : vector<16x8xf32>
    %cst_25 = arith.constant 1.000000e+00 : f32
    %50 = vector.broadcast %cst_25 : f32 to vector<16x8xf32>
    %51 = arith.subf %47, %50 : vector<16x8xf32>
    %52 = arith.mulf %39, %51 : vector<16x8xf32>
    %cst_26 = arith.constant 1.000000e+00 : f32
    %53 = vector.broadcast %cst_26 : f32 to vector<16x8xf32>
    %54 = arith.addf %47, %53 : vector<16x8xf32>
    %55 = arith.divf %52, %54 : vector<16x8xf32>
    %56 = arith.select %49, %39, %55 : vector<16x8xi1>, vector<16x8xf32>
    %c0_27 = arith.constant 0 : index
    %c0_28 = arith.constant 0 : index
    %c0_29 = arith.constant 0 : index
    %57 = vector.load %arg2[%c0_27, %c0_28, %c0_29] : memref<2x1x8xf32, #tpu.memory_space<vmem>>, vector<1x1x8xf32>
    %58 = vector.shape_cast %57 : vector<1x1x8xf32> to vector<1x8xf32>
    %59 = vector.broadcast %58 : vector<1x8xf32> to vector<16x8xf32>
    %60 = arith.addf %56, %59 : vector<16x8xf32>
    %c2_30 = arith.constant 2 : index
    %c0_31 = arith.constant 0 : index
    %61 = vector.load %arg8[%c2_30, %c0_31] : memref<20x8xf32, #tpu.memory_space<vmem>>, vector<16x8xf32>
    tpu.vector_store %arg8[%c2_30, %c0_31], %60 {strides = array<i32>} : memref<20x8xf32, #tpu.memory_space<vmem>>, vector<16x8xf32>,
    %cst_32 = arith.constant 0.000000e+00 : f32
    %62 = vector.broadcast %cst_32 : f32 to vector<16x8xf32>
    %63 = vector.broadcast %6 : vector<1x8xf32> to vector<16x8xf32>
    %64 = arith.addf %62, %63 : vector<16x8xf32>
    %c0_33 = arith.constant 0 : index
    %c0_34 = arith.constant 0 : index
    %65 = vector.load %arg8[%c0_33, %c0_34] : memref<20x8xf32, #tpu.memory_space<vmem>>, vector<16x8xf32>
    %c0_35 = arith.constant 0 : index
    %c0_36 = arith.constant 0 : index
    %c0_37 = arith.constant 0 : index
    %66 = vector.load %arg4[%c0_35, %c0_36, %c0_37] : memref<5x8x8xf32, #tpu.memory_space<vmem>>, vector<1x8x8xf32>
    %67 = vector.shape_cast %66 : vector<1x8x8xf32> to vector<8x8xf32>
    %cst_38 = arith.constant dense<0.000000e+00> : vector<16x8xf32>
    %68 = tpu.matmul %65, %67, %cst_38 {dimension_numbers = #tpu.dot_dimension_numbers<[1], [0], [0], [1], [0, 0, 1, 1], [], []>} : vector<16x8xf32>, vector<8x8xf32>, vector<16x8xf32> -> vector<16x8xf32>
    %69 = arith.addf %64, %68 : vector<16x8xf32>
    %c1_39 = arith.constant 1 : index
    %c0_40 = arith.constant 0 : index
    %70 = vector.load %arg8[%c1_39, %c0_40] : memref<20x8xf32, #tpu.memory_space<vmem>>, vector<16x8xf32>
    %c1_41 = arith.constant 1 : index
    %c0_42 = arith.constant 0 : index
    %c0_43 = arith.constant 0 : index
    %71 = vector.load %arg4[%c1_41, %c0_42, %c0_43] : memref<5x8x8xf32, #tpu.memory_space<vmem>>, vector<1x8x8xf32>
    %72 = vector.shape_cast %71 : vector<1x8x8xf32> to vector<8x8xf32>
    %cst_44 = arith.constant dense<0.000000e+00> : vector<16x8xf32>
    %73 = tpu.matmul %70, %72, %cst_44 {dimension_numbers = #tpu.dot_dimension_numbers<[1], [0], [0], [1], [0, 0, 1, 1], [], []>} : vector<16x8xf32>, vector<8x8xf32>, vector<16x8xf32> -> vector<16x8xf32>
    %74 = arith.addf %69, %73 : vector<16x8xf32>
    %c2_45 = arith.constant 2 : index
    %c0_46 = arith.constant 0 : index
    %75 = vector.load %arg8[%c2_45, %c0_46] : memref<20x8xf32, #tpu.memory_space<vmem>>, vector<16x8xf32>
    %c2_47 = arith.constant 2 : index
    %c0_48 = arith.constant 0 : index
    %c0_49 = arith.constant 0 : index
    %76 = vector.load %arg4[%c2_47, %c0_48, %c0_49] : memref<5x8x8xf32, #tpu.memory_space<vmem>>, vector<1x8x8xf32>
    %77 = vector.shape_cast %76 : vector<1x8x8xf32> to vector<8x8xf32>
    %cst_50 = arith.constant dense<0.000000e+00> : vector<16x8xf32>
    %78 = tpu.matmul %75, %77, %cst_50 {dimension_numbers = #tpu.dot_dimension_numbers<[1], [0], [0], [1], [0, 0, 1, 1], [], []>} : vector<16x8xf32>, vector<8x8xf32>, vector<16x8xf32> -> vector<16x8xf32>
    %79 = arith.addf %74, %78 : vector<16x8xf32>
    %c3_51 = arith.constant 3 : index
    %c0_52 = arith.constant 0 : index
    %80 = vector.load %arg8[%c3_51, %c0_52] : memref<20x8xf32, #tpu.memory_space<vmem>>, vector<16x8xf32>
    %c3_53 = arith.constant 3 : index
    %c0_54 = arith.constant 0 : index
    %c0_55 = arith.constant 0 : index
    %81 = vector.load %arg4[%c3_53, %c0_54, %c0_55] : memref<5x8x8xf32, #tpu.memory_space<vmem>>, vector<1x8x8xf32>
    %82 = vector.shape_cast %81 : vector<1x8x8xf32> to vector<8x8xf32>
    %cst_56 = arith.constant dense<0.000000e+00> : vector<16x8xf32>
    %83 = tpu.matmul %80, %82, %cst_56 {dimension_numbers = #tpu.dot_dimension_numbers<[1], [0], [0], [1], [0, 0, 1, 1], [], []>} : vector<16x8xf32>, vector<8x8xf32>, vector<16x8xf32> -> vector<16x8xf32>
    %84 = arith.addf %79, %83 : vector<16x8xf32>
    %c4_57 = arith.constant 4 : index
    %c0_58 = arith.constant 0 : index
    %85 = vector.load %arg8[%c4_57, %c0_58] : memref<20x8xf32, #tpu.memory_space<vmem>>, vector<16x8xf32>
    %c4_59 = arith.constant 4 : index
    %c0_60 = arith.constant 0 : index
    %c0_61 = arith.constant 0 : index
    %86 = vector.load %arg4[%c4_59, %c0_60, %c0_61] : memref<5x8x8xf32, #tpu.memory_space<vmem>>, vector<1x8x8xf32>
    %87 = vector.shape_cast %86 : vector<1x8x8xf32> to vector<8x8xf32>
    %cst_62 = arith.constant dense<0.000000e+00> : vector<16x8xf32>
    %88 = tpu.matmul %85, %87, %cst_62 {dimension_numbers = #tpu.dot_dimension_numbers<[1], [0], [0], [1], [0, 0, 1, 1], [], []>} : vector<16x8xf32>, vector<8x8xf32>, vector<16x8xf32> -> vector<16x8xf32>
    %89 = arith.addf %84, %88 : vector<16x8xf32>
    %cst_63 = arith.constant dense<0.000000e+00> : vector<8xf32>
    %90 = vector.multi_reduction <add>, %89, %cst_63 [0] : vector<16x8xf32> to vector<8xf32>
    %91 = vector.shape_cast %90 : vector<8xf32> to vector<1x8xf32>
    %cst_64 = arith.constant 1.600000e+01 : f32
    %92 = vector.broadcast %cst_64 : f32 to vector<1x8xf32>
    %93 = arith.divf %91, %92 : vector<1x8xf32>
    %94 = vector.broadcast %93 : vector<1x8xf32> to vector<16x8xf32>
    %95 = arith.subf %89, %94 : vector<16x8xf32>
    %96 = vector.broadcast %93 : vector<1x8xf32> to vector<16x8xf32>
    %97 = arith.subf %89, %96 : vector<16x8xf32>
    %98 = arith.mulf %95, %97 : vector<16x8xf32>
    %cst_65 = arith.constant dense<0.000000e+00> : vector<8xf32>
    %99 = vector.multi_reduction <add>, %98, %cst_65 [0] : vector<16x8xf32> to vector<8xf32>
    %100 = vector.shape_cast %99 : vector<8xf32> to vector<1x8xf32>
    %cst_66 = arith.constant 1.600000e+01 : f32
    %101 = vector.broadcast %cst_66 : f32 to vector<1x8xf32>
    %102 = arith.divf %100, %101 : vector<1x8xf32>
    %103 = vector.broadcast %93 : vector<1x8xf32> to vector<16x8xf32>
    %104 = arith.subf %89, %103 : vector<16x8xf32>
    %cst_67 = arith.constant 9.99999974E-6 : f32
    %105 = vector.broadcast %cst_67 : f32 to vector<1x8xf32>
    %106 = arith.addf %102, %105 : vector<1x8xf32>
    %107 = math.rsqrt %106 : vector<1x8xf32>
    %108 = vector.broadcast %107 : vector<1x8xf32> to vector<16x8xf32>
    %109 = arith.mulf %104, %108 : vector<16x8xf32>
    %110 = vector.broadcast %7 : vector<1x8xf32> to vector<16x8xf32>
    %111 = arith.mulf %109, %110 : vector<16x8xf32>
    %112 = vector.broadcast %8 : vector<1x8xf32> to vector<16x8xf32>
    %113 = arith.addf %111, %112 : vector<16x8xf32>
    %cst_68 = arith.constant 2.000000e+01 : f32
    %114 = vector.broadcast %cst_68 : f32 to vector<16x8xf32>
    %115 = arith.minimumf %113, %114 : vector<16x8xf32>
    %116 = math.exp %115 : vector<16x8xf32>
    %cst_69 = arith.constant 1.000000e+00 : f32
    %117 = vector.broadcast %cst_69 : f32 to vector<16x8xf32>
    %118 = arith.addf %117, %116 : vector<16x8xf32>
    %cst_70 = arith.constant 1.000000e+00 : f32
    %119 = vector.broadcast %cst_70 : f32 to vector<16x8xf32>
    %120 = arith.addf %119, %116 : vector<16x8xf32>
    %121 = arith.mulf %118, %120 : vector<16x8xf32>
    %cst_71 = arith.constant 2.000000e+01 : f32
    %122 = vector.broadcast %cst_71 : f32 to vector<16x8xf32>
    %123 = arith.cmpf ogt, %113, %122 : vector<16x8xf32>
    %cst_72 = arith.constant 1.000000e+00 : f32
    %124 = vector.broadcast %cst_72 : f32 to vector<16x8xf32>
    %125 = arith.subf %121, %124 : vector<16x8xf32>
    %126 = arith.mulf %113, %125 : vector<16x8xf32>
    %cst_73 = arith.constant 1.000000e+00 : f32
    %127 = vector.broadcast %cst_73 : f32 to vector<16x8xf32>
    %128 = arith.addf %121, %127 : vector<16x8xf32>
    %129 = arith.divf %126, %128 : vector<16x8xf32>
    %130 = arith.select %123, %113, %129 : vector<16x8xi1>, vector<16x8xf32>
    %c0_74 = arith.constant 0 : index
    %c0_75 = arith.constant 0 : index
    %c0_76 = arith.constant 0 : index
    %131 = vector.load %arg0[%c0_74, %c0_75, %c0_76] : memref<2x16x4xf32, #tpu.memory_space<vmem>>, vector<1x16x4xf32>
    %132 = vector.shape_cast %131 : vector<1x16x4xf32> to vector<16x4xf32>
    %c0_77 = arith.constant 0 : index
    %c0_78 = arith.constant 0 : index
    %133 = vector.load %arg5[%c0_77, %c0_78] : memref<4x8xf32, #tpu.memory_space<vmem>>, vector<4x8xf32>
    %cst_79 = arith.constant dense<0.000000e+00> : vector<16x8xf32>
    %134 = tpu.matmul %132, %133, %cst_79 {dimension_numbers = #tpu.dot_dimension_numbers<[1], [0], [0], [1], [0, 0, 1, 1], [], []>} : vector<16x4xf32>, vector<4x8xf32>, vector<16x8xf32> -> vector<16x8xf32>
    %135 = vector.broadcast %9 : vector<1x8xf32> to vector<16x8xf32>
    %136 = arith.addf %134, %135 : vector<16x8xf32>
    %137 = arith.addf %130, %136 : vector<16x8xf32>
    %c0_80 = arith.constant 0 : index
    %c0_81 = arith.constant 0 : index
    %c0_82 = arith.constant 0 : index
    %138 = vector.load %arg7[%c0_80, %c0_81, %c0_82] : memref<2x16x8xf32, #tpu.memory_space<vmem>>, vector<1x16x8xf32>
    %139 = vector.shape_cast %138 : vector<1x16x8xf32> to vector<16x8xf32>
    %140 = vector.shape_cast %137 : vector<16x8xf32> to vector<1x16x8xf32>
    tpu.vector_store %arg7[%c0_80, %c0_81, %c0_82], %140 {strides = array<i32>} : memref<2x16x8xf32, #tpu.memory_space<vmem>>, vector<1x16x8xf32>,
    %c1_83 = arith.constant 1 : index
    %c0_84 = arith.constant 0 : index
    %c0_85 = arith.constant 0 : index
    %141 = vector.load %arg1[%c1_83, %c0_84, %c0_85] : memref<2x16x20xf32, #tpu.memory_space<vmem>>, vector<1x16x20xf32>
    %142 = vector.shape_cast %141 : vector<1x16x20xf32> to vector<16x20xf32>
    %c0_86 = arith.constant 0 : index
    %c0_87 = arith.constant 0 : index
    %143 = vector.load %arg3[%c0_86, %c0_87] : memref<20x8xf32, #tpu.memory_space<vmem>>, vector<20x8xf32>
    %cst_88 = arith.constant dense<0.000000e+00> : vector<16x8xf32>
    %144 = tpu.matmul %142, %143, %cst_88 {dimension_numbers = #tpu.dot_dimension_numbers<[1], [0], [0], [1], [0, 0, 1, 1], [], []>} : vector<16x20xf32>, vector<20x8xf32>, vector<16x8xf32> -> vector<16x8xf32>
    %145 = vector.broadcast %3 : vector<1x8xf32> to vector<16x8xf32>
    %146 = arith.addf %144, %145 : vector<16x8xf32>
    %cst_89 = arith.constant dense<0.000000e+00> : vector<8xf32>
    %147 = vector.multi_reduction <add>, %146, %cst_89 [0] : vector<16x8xf32> to vector<8xf32>
    %148 = vector.shape_cast %147 : vector<8xf32> to vector<1x8xf32>
    %cst_90 = arith.constant 1.600000e+01 : f32
    %149 = vector.broadcast %cst_90 : f32 to vector<1x8xf32>
    %150 = arith.divf %148, %149 : vector<1x8xf32>
    %151 = vector.broadcast %150 : vector<1x8xf32> to vector<16x8xf32>
    %152 = arith.subf %146, %151 : vector<16x8xf32>
    %153 = vector.broadcast %150 : vector<1x8xf32> to vector<16x8xf32>
    %154 = arith.subf %146, %153 : vector<16x8xf32>
    %155 = arith.mulf %152, %154 : vector<16x8xf32>
    %cst_91 = arith.constant dense<0.000000e+00> : vector<8xf32>
    %156 = vector.multi_reduction <add>, %155, %cst_91 [0] : vector<16x8xf32> to vector<8xf32>
    %157 = vector.shape_cast %156 : vector<8xf32> to vector<1x8xf32>
    %cst_92 = arith.constant 1.600000e+01 : f32
    %158 = vector.broadcast %cst_92 : f32 to vector<1x8xf32>
    %159 = arith.divf %157, %158 : vector<1x8xf32>
    %160 = vector.broadcast %150 : vector<1x8xf32> to vector<16x8xf32>
    %161 = arith.subf %146, %160 : vector<16x8xf32>
    %cst_93 = arith.constant 9.99999974E-6 : f32
    %162 = vector.broadcast %cst_93 : f32 to vector<1x8xf32>
    %163 = arith.addf %159, %162 : vector<1x8xf32>
    %164 = math.rsqrt %163 : vector<1x8xf32>
    %165 = vector.broadcast %164 : vector<1x8xf32> to vector<16x8xf32>
    %166 = arith.mulf %161, %165 : vector<16x8xf32>
    %167 = vector.broadcast %4 : vector<1x8xf32> to vector<16x8xf32>
    %168 = arith.mulf %166, %167 : vector<16x8xf32>
    %169 = vector.broadcast %5 : vector<1x8xf32> to vector<16x8xf32>
    %170 = arith.addf %168, %169 : vector<16x8xf32>
    %cst_94 = arith.constant 2.000000e+01 : f32
    %171 = vector.broadcast %cst_94 : f32 to vector<16x8xf32>
    %172 = arith.minimumf %170, %171 : vector<16x8xf32>
    %173 = math.exp %172 : vector<16x8xf32>
    %cst_95 = arith.constant 1.000000e+00 : f32
    %174 = vector.broadcast %cst_95 : f32 to vector<16x8xf32>
    %175 = arith.addf %174, %173 : vector<16x8xf32>
    %cst_96 = arith.constant 1.000000e+00 : f32
    %176 = vector.broadcast %cst_96 : f32 to vector<16x8xf32>
    %177 = arith.addf %176, %173 : vector<16x8xf32>
    %178 = arith.mulf %175, %177 : vector<16x8xf32>
    %cst_97 = arith.constant 2.000000e+01 : f32
    %179 = vector.broadcast %cst_97 : f32 to vector<16x8xf32>
    %180 = arith.cmpf ogt, %170, %179 : vector<16x8xf32>
    %cst_98 = arith.constant 1.000000e+00 : f32
    %181 = vector.broadcast %cst_98 : f32 to vector<16x8xf32>
    %182 = arith.subf %178, %181 : vector<16x8xf32>
    %183 = arith.mulf %170, %182 : vector<16x8xf32>
    %cst_99 = arith.constant 1.000000e+00 : f32
    %184 = vector.broadcast %cst_99 : f32 to vector<16x8xf32>
    %185 = arith.addf %178, %184 : vector<16x8xf32>
    %186 = arith.divf %183, %185 : vector<16x8xf32>
    %187 = arith.select %180, %170, %186 : vector<16x8xi1>, vector<16x8xf32>
    %c1_100 = arith.constant 1 : index
    %c0_101 = arith.constant 0 : index
    %c0_102 = arith.constant 0 : index
    %188 = vector.load %arg2[%c1_100, %c0_101, %c0_102] : memref<2x1x8xf32, #tpu.memory_space<vmem>>, vector<1x1x8xf32>
    %189 = vector.shape_cast %188 : vector<1x1x8xf32> to vector<1x8xf32>
    %190 = vector.broadcast %189 : vector<1x8xf32> to vector<16x8xf32>
    %191 = arith.addf %187, %190 : vector<16x8xf32>
    %c2_103 = arith.constant 2 : index
    %c0_104 = arith.constant 0 : index
    %192 = vector.load %arg8[%c2_103, %c0_104] : memref<20x8xf32, #tpu.memory_space<vmem>>, vector<16x8xf32>
    tpu.vector_store %arg8[%c2_103, %c0_104], %191 {strides = array<i32>} : memref<20x8xf32, #tpu.memory_space<vmem>>, vector<16x8xf32>,
    %cst_105 = arith.constant 0.000000e+00 : f32
    %193 = vector.broadcast %cst_105 : f32 to vector<16x8xf32>
    %194 = vector.broadcast %6 : vector<1x8xf32> to vector<16x8xf32>
    %195 = arith.addf %193, %194 : vector<16x8xf32>
    %c0_106 = arith.constant 0 : index
    %c0_107 = arith.constant 0 : index
    %196 = vector.load %arg8[%c0_106, %c0_107] : memref<20x8xf32, #tpu.memory_space<vmem>>, vector<16x8xf32>
    %c0_108 = arith.constant 0 : index
    %c0_109 = arith.constant 0 : index
    %c0_110 = arith.constant 0 : index
    %197 = vector.load %arg4[%c0_108, %c0_109, %c0_110] : memref<5x8x8xf32, #tpu.memory_space<vmem>>, vector<1x8x8xf32>
    %198 = vector.shape_cast %197 : vector<1x8x8xf32> to vector<8x8xf32>
    %cst_111 = arith.constant dense<0.000000e+00> : vector<16x8xf32>
    %199 = tpu.matmul %196, %198, %cst_111 {dimension_numbers = #tpu.dot_dimension_numbers<[1], [0], [0], [1], [0, 0, 1, 1], [], []>} : vector<16x8xf32>, vector<8x8xf32>, vector<16x8xf32> -> vector<16x8xf32>
    %200 = arith.addf %195, %199 : vector<16x8xf32>
    %c1_112 = arith.constant 1 : index
    %c0_113 = arith.constant 0 : index
    %201 = vector.load %arg8[%c1_112, %c0_113] : memref<20x8xf32, #tpu.memory_space<vmem>>, vector<16x8xf32>
    %c1_114 = arith.constant 1 : index
    %c0_115 = arith.constant 0 : index
    %c0_116 = arith.constant 0 : index
    %202 = vector.load %arg4[%c1_114, %c0_115, %c0_116] : memref<5x8x8xf32, #tpu.memory_space<vmem>>, vector<1x8x8xf32>
    %203 = vector.shape_cast %202 : vector<1x8x8xf32> to vector<8x8xf32>
    %cst_117 = arith.constant dense<0.000000e+00> : vector<16x8xf32>
    %204 = tpu.matmul %201, %203, %cst_117 {dimension_numbers = #tpu.dot_dimension_numbers<[1], [0], [0], [1], [0, 0, 1, 1], [], []>} : vector<16x8xf32>, vector<8x8xf32>, vector<16x8xf32> -> vector<16x8xf32>
    %205 = arith.addf %200, %204 : vector<16x8xf32>
    %c2_118 = arith.constant 2 : index
    %c0_119 = arith.constant 0 : index
    %206 = vector.load %arg8[%c2_118, %c0_119] : memref<20x8xf32, #tpu.memory_space<vmem>>, vector<16x8xf32>
    %c2_120 = arith.constant 2 : index
    %c0_121 = arith.constant 0 : index
    %c0_122 = arith.constant 0 : index
    %207 = vector.load %arg4[%c2_120, %c0_121, %c0_122] : memref<5x8x8xf32, #tpu.memory_space<vmem>>, vector<1x8x8xf32>
    %208 = vector.shape_cast %207 : vector<1x8x8xf32> to vector<8x8xf32>
    %cst_123 = arith.constant dense<0.000000e+00> : vector<16x8xf32>
    %209 = tpu.matmul %206, %208, %cst_123 {dimension_numbers = #tpu.dot_dimension_numbers<[1], [0], [0], [1], [0, 0, 1, 1], [], []>} : vector<16x8xf32>, vector<8x8xf32>, vector<16x8xf32> -> vector<16x8xf32>
    %210 = arith.addf %205, %209 : vector<16x8xf32>
    %c3_124 = arith.constant 3 : index
    %c0_125 = arith.constant 0 : index
    %211 = vector.load %arg8[%c3_124, %c0_125] : memref<20x8xf32, #tpu.memory_space<vmem>>, vector<16x8xf32>
    %c3_126 = arith.constant 3 : index
    %c0_127 = arith.constant 0 : index
    %c0_128 = arith.constant 0 : index
    %212 = vector.load %arg4[%c3_126, %c0_127, %c0_128] : memref<5x8x8xf32, #tpu.memory_space<vmem>>, vector<1x8x8xf32>
    %213 = vector.shape_cast %212 : vector<1x8x8xf32> to vector<8x8xf32>
    %cst_129 = arith.constant dense<0.000000e+00> : vector<16x8xf32>
    %214 = tpu.matmul %211, %213, %cst_129 {dimension_numbers = #tpu.dot_dimension_numbers<[1], [0], [0], [1], [0, 0, 1, 1], [], []>} : vector<16x8xf32>, vector<8x8xf32>, vector<16x8xf32> -> vector<16x8xf32>
    %215 = arith.addf %210, %214 : vector<16x8xf32>
    %c4_130 = arith.constant 4 : index
    %c0_131 = arith.constant 0 : index
    %216 = vector.load %arg8[%c4_130, %c0_131] : memref<20x8xf32, #tpu.memory_space<vmem>>, vector<16x8xf32>
    %c4_132 = arith.constant 4 : index
    %c0_133 = arith.constant 0 : index
    %c0_134 = arith.constant 0 : index
    %217 = vector.load %arg4[%c4_132, %c0_133, %c0_134] : memref<5x8x8xf32, #tpu.memory_space<vmem>>, vector<1x8x8xf32>
    %218 = vector.shape_cast %217 : vector<1x8x8xf32> to vector<8x8xf32>
    %cst_135 = arith.constant dense<0.000000e+00> : vector<16x8xf32>
    %219 = tpu.matmul %216, %218, %cst_135 {dimension_numbers = #tpu.dot_dimension_numbers<[1], [0], [0], [1], [0, 0, 1, 1], [], []>} : vector<16x8xf32>, vector<8x8xf32>, vector<16x8xf32> -> vector<16x8xf32>
    %220 = arith.addf %215, %219 : vector<16x8xf32>
    %cst_136 = arith.constant dense<0.000000e+00> : vector<8xf32>
    %221 = vector.multi_reduction <add>, %220, %cst_136 [0] : vector<16x8xf32> to vector<8xf32>
    %222 = vector.shape_cast %221 : vector<8xf32> to vector<1x8xf32>
    %cst_137 = arith.constant 1.600000e+01 : f32
    %223 = vector.broadcast %cst_137 : f32 to vector<1x8xf32>
    %224 = arith.divf %222, %223 : vector<1x8xf32>
    %225 = vector.broadcast %224 : vector<1x8xf32> to vector<16x8xf32>
    %226 = arith.subf %220, %225 : vector<16x8xf32>
    %227 = vector.broadcast %224 : vector<1x8xf32> to vector<16x8xf32>
    %228 = arith.subf %220, %227 : vector<16x8xf32>
    %229 = arith.mulf %226, %228 : vector<16x8xf32>
    %cst_138 = arith.constant dense<0.000000e+00> : vector<8xf32>
    %230 = vector.multi_reduction <add>, %229, %cst_138 [0] : vector<16x8xf32> to vector<8xf32>
    %231 = vector.shape_cast %230 : vector<8xf32> to vector<1x8xf32>
    %cst_139 = arith.constant 1.600000e+01 : f32
    %232 = vector.broadcast %cst_139 : f32 to vector<1x8xf32>
    %233 = arith.divf %231, %232 : vector<1x8xf32>
    %234 = vector.broadcast %224 : vector<1x8xf32> to vector<16x8xf32>
    %235 = arith.subf %220, %234 : vector<16x8xf32>
    %cst_140 = arith.constant 9.99999974E-6 : f32
    %236 = vector.broadcast %cst_140 : f32 to vector<1x8xf32>
    %237 = arith.addf %233, %236 : vector<1x8xf32>
    %238 = math.rsqrt %237 : vector<1x8xf32>
    %239 = vector.broadcast %238 : vector<1x8xf32> to vector<16x8xf32>
    %240 = arith.mulf %235, %239 : vector<16x8xf32>
    %241 = vector.broadcast %7 : vector<1x8xf32> to vector<16x8xf32>
    %242 = arith.mulf %240, %241 : vector<16x8xf32>
    %243 = vector.broadcast %8 : vector<1x8xf32> to vector<16x8xf32>
    %244 = arith.addf %242, %243 : vector<16x8xf32>
    %cst_141 = arith.constant 2.000000e+01 : f32
    %245 = vector.broadcast %cst_141 : f32 to vector<16x8xf32>
    %246 = arith.minimumf %244, %245 : vector<16x8xf32>
    %247 = math.exp %246 : vector<16x8xf32>
    %cst_142 = arith.constant 1.000000e+00 : f32
    %248 = vector.broadcast %cst_142 : f32 to vector<16x8xf32>
    %249 = arith.addf %248, %247 : vector<16x8xf32>
    %cst_143 = arith.constant 1.000000e+00 : f32
    %250 = vector.broadcast %cst_143 : f32 to vector<16x8xf32>
    %251 = arith.addf %250, %247 : vector<16x8xf32>
    %252 = arith.mulf %249, %251 : vector<16x8xf32>
    %cst_144 = arith.constant 2.000000e+01 : f32
    %253 = vector.broadcast %cst_144 : f32 to vector<16x8xf32>
    %254 = arith.cmpf ogt, %244, %253 : vector<16x8xf32>
    %cst_145 = arith.constant 1.000000e+00 : f32
    %255 = vector.broadcast %cst_145 : f32 to vector<16x8xf32>
    %256 = arith.subf %252, %255 : vector<16x8xf32>
    %257 = arith.mulf %244, %256 : vector<16x8xf32>
    %cst_146 = arith.constant 1.000000e+00 : f32
    %258 = vector.broadcast %cst_146 : f32 to vector<16x8xf32>
    %259 = arith.addf %252, %258 : vector<16x8xf32>
    %260 = arith.divf %257, %259 : vector<16x8xf32>
    %261 = arith.select %254, %244, %260 : vector<16x8xi1>, vector<16x8xf32>
    %c1_147 = arith.constant 1 : index
    %c0_148 = arith.constant 0 : index
    %c0_149 = arith.constant 0 : index
    %262 = vector.load %arg0[%c1_147, %c0_148, %c0_149] : memref<2x16x4xf32, #tpu.memory_space<vmem>>, vector<1x16x4xf32>
    %263 = vector.shape_cast %262 : vector<1x16x4xf32> to vector<16x4xf32>
    %c0_150 = arith.constant 0 : index
    %c0_151 = arith.constant 0 : index
    %264 = vector.load %arg5[%c0_150, %c0_151] : memref<4x8xf32, #tpu.memory_space<vmem>>, vector<4x8xf32>
    %cst_152 = arith.constant dense<0.000000e+00> : vector<16x8xf32>
    %265 = tpu.matmul %263, %264, %cst_152 {dimension_numbers = #tpu.dot_dimension_numbers<[1], [0], [0], [1], [0, 0, 1, 1], [], []>} : vector<16x4xf32>, vector<4x8xf32>, vector<16x8xf32> -> vector<16x8xf32>
    %266 = vector.broadcast %9 : vector<1x8xf32> to vector<16x8xf32>
    %267 = arith.addf %265, %266 : vector<16x8xf32>
    %268 = arith.addf %261, %267 : vector<16x8xf32>
    %c1_153 = arith.constant 1 : index
    %c0_154 = arith.constant 0 : index
    %c0_155 = arith.constant 0 : index
    %269 = vector.load %arg7[%c1_153, %c0_154, %c0_155] : memref<2x16x8xf32, #tpu.memory_space<vmem>>, vector<1x16x8xf32>
    %270 = vector.shape_cast %269 : vector<1x16x8xf32> to vector<16x8xf32>
    %271 = vector.shape_cast %268 : vector<16x8xf32> to vector<1x16x8xf32>
    tpu.vector_store %arg7[%c1_153, %c0_154, %c0_155], %271 {strides = array<i32>} : memref<2x16x8xf32, #tpu.memory_space<vmem>>, vector<1x16x8xf32>,
    return
  }
}

</mosaic_0001>

<llo_original>
// kernel: tpu_custom_call.1
$region0: #{tpu_custom_call.1}
  #allocation0 [shape = 'u32[]', space=smem, size = 0x4, offset = 0x4, fixed_abs, tag = 'smem constant byte address 0x4 - core index']
  #allocation1 [shape = 'u32[144,128]{1,0:T(1,128)}', space=vmem, size = 0x12000, scoped, tag = 'internal scratch']
  #allocation2 [shape = 'f32[20,8]{1,0:T(8,128)}', space=vmem, size = 0x3000, scoped, tag = 'scratch operand']
  %s0 = inlined_call_operand.vmem [shape: f32[2,16,4], index: 0, kind: input, shape index: {}]
  %s1 = inlined_call_operand.vmem [shape: f32[2,16,20], index: 1, kind: input, shape index: {}]
  %s2 = inlined_call_operand.hbm [shape: f32[2,1,8], index: 2, kind: input, shape index: {}]
  %s3 = inlined_call_operand.vmem [shape: f32[20,8], index: 3, kind: input, shape index: {}]
  %s4 = inlined_call_operand.vmem [shape: f32[5,8,8], index: 4, kind: input, shape index: {}]
  %s5 = inlined_call_operand.hbm [shape: f32[4,8], index: 5, kind: input, shape index: {}]
  %s6 = inlined_call_operand.vmem [shape: f32[8,8], index: 6, kind: input, shape index: {}]
  %s7 = inlined_call_operand.vmem [shape: f32[2,16,8], index: 7, kind: output, shape index: {}]
  %s8 = sld [smem:[#allocation0]]
  $region46: #{tpu_custom_call.1} parent=0
    _
  %s10 = ssub.s32 1, %s8
  %s11 = scalar_select 0, %s10, %s8
  $region1: #{tpu_custom_call.1} parent=0
    #allocation3 [shape = 'u8[1024]{0}', space=vmem, size = 0x400, scoped, tag = 'input window, operand 2, single buffered']
    #allocation4 [shape = 's32[1]{0}', space=sflag, size = 0x4, scoped, tag = 'scoped memory for tpu_custom_call.1']
    #allocation5 [shape = 'u8[2048]{0}', space=vmem, size = 0x800, scoped, tag = 'input window, operand 5, single buffered']
    #allocation6 [shape = 's32[1]{0}', space=sflag, size = 0x4, scoped, tag = 'scoped memory for tpu_custom_call.1']
    %12 = vsyncpa [#allocation4], 0
    %13 = vsyncpa [#allocation6], 0
    // Predicated region
    $region2: #{tpu_custom_call.1} parent=1 // pred_check
      _
    $region3: #{tpu_custom_call.1} parent=1 // pred_check_branch
      %15 = sbr.rel (0) target = $region5
    $region4: #{tpu_custom_call.1} parent=1 // pred_region
      _
    $region5: #{tpu_custom_call.1} parent=1 // pred_fallthru
      _
    // Predicated region
    $region6: #{tpu_custom_call.1} parent=1 // pred_check
      _
    $region7: #{tpu_custom_call.1} parent=1 // pred_check_branch
      %17 = sbr.rel (0) target = $region9
    $region8: #{tpu_custom_call.1} parent=1 // pred_region
      _
    $region9: #{tpu_custom_call.1} parent=1 // pred_fallthru
      _
    // Predicated region
    $region10: #{tpu_custom_call.1} parent=1 // pred_check
      _
    $region11: #{tpu_custom_call.1} parent=1 // pred_check_branch
      %19 = sbr.rel (0) target = $region13
    $region12: #{tpu_custom_call.1} parent=1 // pred_region
      %s21 = ssub.s32 32, 32
      %22 = vsyncadd [#allocation4], %s21
      %s23 = sshll.u32 [#allocation3], 4
      %s24 = int_to_ptr.vmem [resolvable:$true] %s23
      %29 = dma.hbm_to_vmem [thread:$0]  %s2, 32, %s24, [#allocation4], 16, 16, 1
    $region13: #{tpu_custom_call.1} parent=1 // pred_fallthru
      _
    // Predicated region
    $region14: #{tpu_custom_call.1} parent=1 // pred_check
      _
    $region15: #{tpu_custom_call.1} parent=1 // pred_check_branch
      %31 = sbr.rel (0) target = $region17
    $region16: #{tpu_custom_call.1} parent=1 // pred_region
      _
    $region17: #{tpu_custom_call.1} parent=1 // pred_fallthru
      _
    // Predicated region
    $region18: #{tpu_custom_call.1} parent=1 // pred_check
      _
    $region19: #{tpu_custom_call.1} parent=1 // pred_check_branch
      %33 = sbr.rel (0) target = $region21
    $region20: #{tpu_custom_call.1} parent=1 // pred_region
      _
    $region21: #{tpu_custom_call.1} parent=1 // pred_fallthru
      _
    // Predicated region
    $region22: #{tpu_custom_call.1} parent=1 // pred_check
      _
    $region23: #{tpu_custom_call.1} parent=1 // pred_check_branch
      %35 = sbr.rel (0) target = $region25
    $region24: #{tpu_custom_call.1} parent=1 // pred_region
      %s37 = ssub.s32 64, 64
      %38 = vsyncadd [#allocation6], %s37
      %s40 = sshll.u32 [#allocation5], 4
      %s41 = int_to_ptr.vmem [resolvable:$true] %s40
      %43 = dma.hbm_to_vmem [thread:$0]  %s5, 64, %s41, [#allocation6]
    $region25: #{tpu_custom_call.1} parent=1 // pred_fallthru
      _
    // Predicated region
    $region26: #{tpu_custom_call.1} parent=1 // pred_check
      _
    $region27: #{tpu_custom_call.1} parent=1 // pred_check_branch
      %45 = sbr.rel (0) target = $region29
    $region28: #{tpu_custom_call.1} parent=1 // pred_region
      _
    $region29: #{tpu_custom_call.1} parent=1 // pred_fallthru
      _
    // Predicated region
    $region30: #{tpu_custom_call.1} parent=1 // pred_check
      _
    $region31: #{tpu_custom_call.1} parent=1 // pred_check_branch
      %47 = sbr.rel (0) target = $region33
    $region32: #{tpu_custom_call.1} parent=1 // pred_region
      %48 = dma.done [#allocation4], 32
    $region33: #{tpu_custom_call.1} parent=1 // pred_fallthru
      _
    // Predicated region
    $region34: #{tpu_custom_call.1} parent=1 // pred_check
      _
    $region35: #{tpu_custom_call.1} parent=1 // pred_check_branch
      %50 = sbr.rel (0) target = $region37
    $region36: #{tpu_custom_call.1} parent=1 // pred_region
      %51 = dma.done [#allocation6], 64
    $region37: #{tpu_custom_call.1} parent=1 // pred_fallthru
      _
    %vm52 = vcmask 58368
    %53 = vst.msk [vmem:[#allocation2] sm:$0x3] %vm52, 0.0
    %54 = vst.msk [vmem:[#allocation2 + $0x12] sm:$0x3] %vm52, 0.0
    %v55 = vld [vmem:[%s6] sm:$0x1]
    %v56 = vld [vmem:[%s6 + $0x1] sm:$0x1]
    %v57 = vld [vmem:[%s6 + $0x2] sm:$0x1]
    %v58 = vld [vmem:[%s6 + $0x3] sm:$0x1]
    %v59 = vld [vmem:[%s6 + $0x4] sm:$0x1]
    %v60 = vld [vmem:[%s6 + $0x5] sm:$0x1]
    %v61 = vld [vmem:[%s6 + $0x6] sm:$0x1]
    %v62 = vld [vmem:[%s1] sm:$0xff]
    %v63 = vld [vmem:[%s1 + $0x8] sm:$0xff]
    %v64 = vld [vmem:[%s3] sm:$0xff]
    %v65 = vld [vmem:[%s3 + $0x8] sm:$0xff]
    %v66 = vld [vmem:[%s3 + $0x10] sm:$0xf]
    %v67 = vlaneseq
    %v68 = vshrl.u32 %v67, 7
    %v69 = vsub.s32 0, %v68
    %v70 = vrot.slane %v55, %v69
    %vm71 = vcmask 162816
    %v73 = vsel %vm71, %v62, 0
    %v76 = vsel %vm71, %v63, 0
    %vm78 = vcmask 1043456
    %v80 = vsel %vm78, %v66, 0
    %82 = vmatprep.subr.mxu0 0.0
    %83 = vmatpush1.msra.mxu0 0.0
    %84 = vmatprep.subr.mxu0 0.0
    %85 = vmatpush1.msra.mxu0 0.0
    %86 = vmatprep.subr.mxu0 0.0
    %87 = vmatpush1.msra.mxu0 0.0
    %88 = vmatprep.subr.mxu0 0.0
    %89 = vmatpush1.msra.mxu0 0.0
    %90 = vmatprep.subr.mxu0 0.0
    %91 = vmatpush1.msra.mxu0 0.0
    %92 = vmatprep.subr.mxu0 0.0
    %93 = vmatpush1.msra.mxu0 0.0
    %94 = vmatprep.subr.mxu0 0.0
    %95 = vmatpush1.msra.mxu0 0.0
    %96 = vmatprep.subr.mxu0 0.0
    %97 = vmatpush1.msra.mxu0 0.0
    %98 = vmatprep.subr.mxu0 0.0
    %99 = vmatpush1.msra.mxu0 0.0
    %100 = vmatprep.subr.mxu0 0.0
    %101 = vmatpush1.msra.mxu0 0.0
    %102 = vmatprep.subr.mxu0 0.0
    %103 = vmatpush1.msra.mxu0 0.0
    %104 = vmatprep.subr.mxu0 0.0
    %105 = vmatpush1.msra.mxu0 0.0
    %106 = vmatprep.subr.mxu0 0.0
    %107 = vmatpush1.msra.mxu0 0.0
    %108 = vmatprep.subr.mxu0 0.0
    %109 = vmatpush1.msra.mxu0 %v80
    %110 = vmatprep.subr.mxu0 0.0
    %111 = vmatpush1.msra.mxu0 %v65
    %112 = vmatprep.subr.mxu0 0.0
    %113 = vmatpush1.msra.mxu0 %v64
    %114 = vmatprep.subr.mxu0 0.0
    %115 = vmatpush2.msra.mxu0 0.0
    %116 = vmatprep.subr.mxu0 0.0
    %117 = vmatpush2.msra.mxu0 0.0
    %118 = vmatprep.subr.mxu0 0.0
    %119 = vmatpush2.msra.mxu0 0.0
    %120 = vmatprep.subr.mxu0 0.0
    %121 = vmatpush2.msra.mxu0 0.0
    %122 = vmatprep.subr.mxu0 0.0
    %123 = vmatpush2.msra.mxu0 0.0
    %124 = vmatprep.subr.mxu0 0.0
    %125 = vmatpush2.msra.mxu0 0.0
    %126 = vmatprep.subr.mxu0 0.0
    %127 = vmatpush2.msra.mxu0 0.0
    %128 = vmatprep.subr.mxu0 0.0
    %129 = vmatpush2.msra.mxu0 0.0
    %130 = vmatprep.subr.mxu0 0.0
    %131 = vmatpush2.msra.mxu0 0.0
    %132 = vmatprep.subr.mxu0 0.0
    %133 = vmatpush2.msra.mxu0 0.0
    %134 = vmatprep.subr.mxu0 0.0
    %135 = vmatpush2.msra.mxu0 0.0
    %136 = vmatprep.subr.mxu0 0.0
    %137 = vmatpush2.msra.mxu0 0.0
    %138 = vmatprep.subr.mxu0 0.0
    %139 = vmatpush2.msra.mxu0 0.0
    %140 = vmatprep.subr.mxu0 0.0
    %141 = vmatpush2.msra.mxu0 0.0
    %142 = vmatprep.subr.mxu0 0.0
    %143 = vmatpush2.msra.mxu0 0.0
    %144 = vmatprep.subr.mxu0 0.0
    %145 = vmatpush2.msra.mxu0 0.0
    %146 = vmatprep.mubr.f32.mxu0 0.0
    %147 = vmatmul.mubr.f32.gmra.mxu0 %v73
    %v148 = vpop.f32.mrf.mxu0
    %v149 = vadd.f32 %v70, %v148
    %v150 = vpop.f32.mrf.mxu0
    %151 = vmatprep.mubr.f32.mxu0 0.0
    %152 = vmatmul.mubr.f32.gmra.mxu0 %v76
    %v153 = vpop.f32.mrf.mxu0
    %v154 = vadd.f32 %v70, %v153
    %v155 = vpop.f32.mrf.mxu0
    %156 = vdwg.mxu0
    %vm157 = vcmask 64512
    %v158 = vsel %vm157, %v149, 0.0
    %v159 = vsel %vm157, %v154, 0.0
    %v160 = vadd.f32 %v158, %v159
    %v161 = vrot.slane %v160, 4
    %v162 = vadd.f32 %v160, %v161
    %v163 = vrot.slane %v162, 2
    %v164 = vadd.f32 %v162, %v163
    %v165 = vrot.slane %v164, 1
    %v166 = vadd.f32 %v164, %v165
    %v167 = vrcp.pop 16.0
    %v168 = vmul.f32 %v166, %v167
    %v169 = vsub.f32 %v149, %v168
    %v170 = vsub.f32 %v154, %v168
    %v171 = vmul.f32 %v169, %v169
    %v172 = vmul.f32 %v170, %v170
    %v173 = vsel %vm157, %v171, 0.0
    %v174 = vsel %vm157, %v172, 0.0
    %v175 = vadd.f32 %v173, %v174
    %v176 = vrot.slane %v175, 4
    %v177 = vadd.f32 %v175, %v176
    %v178 = vrot.slane %v177, 2
    %v179 = vadd.f32 %v177, %v178
    %v180 = vrot.slane %v179, 1
    %v181 = vadd.f32 %v179, %v180
    %v182 = vmul.f32 %v181, %v167
    %v183 = vadd.f32 %v182, 1e-05
    %v184 = vrsqrt.pop %v183
    %v185 = vmul.f32 %v169, %v184
    %v186 = vmul.f32 %v170, %v184
    %v187 = vlaneseq
    %v188 = vshrl.u32 %v187, 7
    %v189 = vsub.s32 0, %v188
    %v190 = vrot.slane %v56, %v189
    %v191 = vmul.f32 %v185, %v190
    %v192 = vmul.f32 %v186, %v190
    %v193 = vlaneseq
    %v194 = vshrl.u32 %v193, 7
    %v195 = vsub.s32 0, %v194
    %v196 = vrot.slane %v57, %v195
    %v197 = vadd.f32 %v191, %v196
    %v198 = vadd.f32 %v192, %v196
    %v199 = vmin.f32 %v197, 20.0
    %v200 = vmin.f32 %v198, 20.0
    %v201 = vmul.f32 %v199, 1.442695
    %v202 = vpow.pop %v201
    %v203 = vmul.f32 %v200, 1.442695
    %v204 = vpow.pop %v203
    %v205 = vadd.f32 %v202, 1.0
    %v206 = vadd.f32 %v204, 1.0
    %v207 = vmul.f32 %v205, %v205
    %v208 = vmul.f32 %v206, %v206
    %vm209 = vcmp.gt.f32.partialorder %v197, 20.0
    %vm210 = vcmp.gt.f32.partialorder %v198, 20.0
    %v211 = vsub.f32 %v207, 1.0
    %v212 = vsub.f32 %v208, 1.0
    %v213 = vmul.f32 %v197, %v211
    %v214 = vmul.f32 %v198, %v212
    %v215 = vadd.f32 %v207, 1.0
    %v216 = vadd.f32 %v208, 1.0
    %v217 = vrcp.pop %v215
    %v218 = vmul.f32 %v213, %v217
    %v219 = vrcp.pop %v216
    %v220 = vmul.f32 %v214, %v219
    %v221 = vsel %vm209, %v197, %v218
    %v222 = vsel %vm210, %v198, %v220
    %v223 = vld [vmem:[#allocation3] sm:$0x1]
    %v225 = vlaneseq
    %v226 = vshrl.u32 %v225, 7
    %v227 = vsub.s32 0, %v226
    %v228 = vrot.slane %v223, %v227
    %v230 = vadd.f32 %v221, %v228
    %v231 = vadd.f32 %v222, %v228
    %232 = vst.msk [vmem:[#allocation2 + $0x2] sm:$0xff] %vm157, %v230
    %233 = vst.msk [vmem:[#allocation2 + $0xa] sm:$0xff] %vm157, %v231
    %v234 = vlaneseq
    %v235 = vshrl.u32 %v234, 7
    %v236 = vsub.s32 0, %v235
    %v237 = vrot.slane %v58, %v236
    %v238 = vadd.f32 %v237, 0.0
    %v239 = vld [vmem:[#allocation2] sm:$0xff]
    %v240 = vld [vmem:[#allocation2 + $0x8] sm:$0xff]
    %v241 = vld [vmem:[%s4] sm:$0xff]
    %v243 = vsel %vm157, %v239, 0
    %v246 = vsel %vm157, %v240, 0
    %248 = vmatprep.subr.mxu0 0.0
    %249 = vmatpush1.msra.mxu0 0.0
    %250 = vmatprep.subr.mxu0 0.0
    %251 = vmatpush1.msra.mxu0 0.0
    %252 = vmatprep.subr.mxu0 0.0
    %253 = vmatpush1.msra.mxu0 0.0
    %254 = vmatprep.subr.mxu0 0.0
    %255 = vmatpush1.msra.mxu0 0.0
    %256 = vmatprep.subr.mxu0 0.0
    %257 = vmatpush1.msra.mxu0 0.0
    %258 = vmatprep.subr.mxu0 0.0
    %259 = vmatpush1.msra.mxu0 0.0
    %260 = vmatprep.subr.mxu0 0.0
    %261 = vmatpush1.msra.mxu0 0.0
    %262 = vmatprep.subr.mxu0 0.0
    %263 = vmatpush1.msra.mxu0 0.0
    %264 = vmatprep.subr.mxu0 0.0
    %265 = vmatpush1.msra.mxu0 0.0
    %266 = vmatprep.subr.mxu0 0.0
    %267 = vmatpush1.msra.mxu0 0.0
    %268 = vmatprep.subr.mxu0 0.0
    %269 = vmatpush1.msra.mxu0 0.0
    %270 = vmatprep.subr.mxu0 0.0
    %271 = vmatpush1.msra.mxu0 0.0
    %272 = vmatprep.subr.mxu0 0.0
    %273 = vmatpush1.msra.mxu0 0.0
    %274 = vmatprep.subr.mxu0 0.0
    %275 = vmatpush1.msra.mxu0 0.0
    %276 = vmatprep.subr.mxu0 0.0
    %277 = vmatpush1.msra.mxu0 0.0
    %278 = vmatprep.subr.mxu0 0.0
    %279 = vmatpush1.msra.mxu0 %v241
    %280 = vmatprep.subr.mxu0 0.0
    %281 = vmatpush2.msra.mxu0 0.0
    %282 = vmatprep.subr.mxu0 0.0
    %283 = vmatpush2.msra.mxu0 0.0
    %284 = vmatprep.subr.mxu0 0.0
    %285 = vmatpush2.msra.mxu0 0.0
    %286 = vmatprep.subr.mxu0 0.0
    %287 = vmatpush2.msra.mxu0 0.0
    %288 = vmatprep.subr.mxu0 0.0
    %289 = vmatpush2.msra.mxu0 0.0
    %290 = vmatprep.subr.mxu0 0.0
    %291 = vmatpush2.msra.mxu0 0.0
    %292 = vmatprep.subr.mxu0 0.0
    %293 = vmatpush2.msra.mxu0 0.0
    %294 = vmatprep.subr.mxu0 0.0
    %295 = vmatpush2.msra.mxu0 0.0
    %296 = vmatprep.subr.mxu0 0.0
    %297 = vmatpush2.msra.mxu0 0.0
    %298 = vmatprep.subr.mxu0 0.0
    %299 = vmatpush2.msra.mxu0 0.0
    %300 = vmatprep.subr.mxu0 0.0
    %301 = vmatpush2.msra.mxu0 0.0
    %302 = vmatprep.subr.mxu0 0.0
    %303 = vmatpush2.msra.mxu0 0.0
    %304 = vmatprep.subr.mxu0 0.0
    %305 = vmatpush2.msra.mxu0 0.0
    %306 = vmatprep.subr.mxu0 0.0
    %307 = vmatpush2.msra.mxu0 0.0
    %308 = vmatprep.subr.mxu0 0.0
    %309 = vmatpush2.msra.mxu0 0.0
    %310 = vmatprep.subr.mxu0 0.0
    %311 = vmatpush2.msra.mxu0 0.0
    %312 = vmatprep.mubr.f32.mxu0 0.0
    %313 = vmatmul.mubr.f32.gmra.mxu0 %v243
    %v314 = vpop.f32.mrf.mxu0
    %v315 = vadd.f32 0.0, %v314
    %v316 = vpop.f32.mrf.mxu0
    %317 = vmatprep.mubr.f32.mxu0 0.0
    %318 = vmatmul.mubr.f32.gmra.mxu0 %v246
    %v319 = vpop.f32.mrf.mxu0
    %v320 = vadd.f32 0.0, %v319
    %v321 = vpop.f32.mrf.mxu0
    %322 = vdwg.mxu0
    %v323 = vadd.f32 %v238, %v315
    %v324 = vadd.f32 %v238, %v320
    %v325 = vld [vmem:[#allocation2 + $0x1] sm:$0xff]
    %v326 = vld [vmem:[#allocation2 + $0x9] sm:$0xff]
    %s327 = scalar_lea.vmem %s4, 8
    %v328 = vld [vmem:[%s327] sm:$0xff]
    %v330 = vsel %vm157, %v325, 0
    %v333 = vsel %vm157, %v326, 0
    %335 = vmatprep.subr.mxu0 0.0
    %336 = vmatpush1.msra.mxu0 0.0
    %337 = vmatprep.subr.mxu0 0.0
    %338 = vmatpush1.msra.mxu0 0.0
    %339 = vmatprep.subr.mxu0 0.0
    %340 = vmatpush1.msra.mxu0 0.0
    %341 = vmatprep.subr.mxu0 0.0
    %342 = vmatpush1.msra.mxu0 0.0
    %343 = vmatprep.subr.mxu0 0.0
    %344 = vmatpush1.msra.mxu0 0.0
    %345 = vmatprep.subr.mxu0 0.0
    %346 = vmatpush1.msra.mxu0 0.0
    %347 = vmatprep.subr.mxu0 0.0
    %348 = vmatpush1.msra.mxu0 0.0
    %349 = vmatprep.subr.mxu0 0.0
    %350 = vmatpush1.msra.mxu0 0.0
    %351 = vmatprep.subr.mxu0 0.0
    %352 = vmatpush1.msra.mxu0 0.0
    %353 = vmatprep.subr.mxu0 0.0
    %354 = vmatpush1.msra.mxu0 0.0
    %355 = vmatprep.subr.mxu0 0.0
    %356 = vmatpush1.msra.mxu0 0.0
    %357 = vmatprep.subr.mxu0 0.0
    %358 = vmatpush1.msra.mxu0 0.0
    %359 = vmatprep.subr.mxu0 0.0
    %360 = vmatpush1.msra.mxu0 0.0
    %361 = vmatprep.subr.mxu0 0.0
    %362 = vmatpush1.msra.mxu0 0.0
    %363 = vmatprep.subr.mxu0 0.0
    %364 = vmatpush1.msra.mxu0 0.0
    %365 = vmatprep.subr.mxu0 0.0
    %366 = vmatpush1.msra.mxu0 %v328
    %367 = vmatprep.subr.mxu0 0.0
    %368 = vmatpush2.msra.mxu0 0.0
    %369 = vmatprep.subr.mxu0 0.0
    %370 = vmatpush2.msra.mxu0 0.0
    %371 = vmatprep.subr.mxu0 0.0
    %372 = vmatpush2.msra.mxu0 0.0
    %373 = vmatprep.subr.mxu0 0.0
    %374 = vmatpush2.msra.mxu0 0.0
    %375 = vmatprep.subr.mxu0 0.0
    %376 = vmatpush2.msra.mxu0 0.0
    %377 = vmatprep.subr.mxu0 0.0
    %378 = vmatpush2.msra.mxu0 0.0
    %379 = vmatprep.subr.mxu0 0.0
    %380 = vmatpush2.msra.mxu0 0.0
    %381 = vmatprep.subr.mxu0 0.0
    %382 = vmatpush2.msra.mxu0 0.0
    %383 = vmatprep.subr.mxu0 0.0
    %384 = vmatpush2.msra.mxu0 0.0
    %385 = vmatprep.subr.mxu0 0.0
    %386 = vmatpush2.msra.mxu0 0.0
    %387 = vmatprep.subr.mxu0 0.0
    %388 = vmatpush2.msra.mxu0 0.0
    %389 = vmatprep.subr.mxu0 0.0
    %390 = vmatpush2.msra.mxu0 0.0
    %391 = vmatprep.subr.mxu0 0.0
    %392 = vmatpush2.msra.mxu0 0.0
    %393 = vmatprep.subr.mxu0 0.0
    %394 = vmatpush2.msra.mxu0 0.0
    %395 = vmatprep.subr.mxu0 0.0
    %396 = vmatpush2.msra.mxu0 0.0
    %397 = vmatprep.subr.mxu0 0.0
    %398 = vmatpush2.msra.mxu0 0.0
    %399 = vmatprep.mubr.f32.mxu0 0.0
    %400 = vmatmul.mubr.f32.gmra.mxu0 %v330
    %v401 = vpop.f32.mrf.mxu0
    %v402 = vadd.f32 0.0, %v401
    %v403 = vpop.f32.mrf.mxu0
    %404 = vmatprep.mubr.f32.mxu0 0.0
    %405 = vmatmul.mubr.f32.gmra.mxu0 %v333
    %v406 = vpop.f32.mrf.mxu0
    %v407 = vadd.f32 0.0, %v406
    %v408 = vpop.f32.mrf.mxu0
    %409 = vdwg.mxu0
    %v410 = vadd.f32 %v323, %v402
    %v411 = vadd.f32 %v324, %v407
    %v412 = vld [vmem:[#allocation2 + $0x2] sm:$0xff]
    %v413 = vld [vmem:[#allocation2 + $0xa] sm:$0xff]
    %s414 = scalar_lea.vmem %s4, 16
    %v415 = vld [vmem:[%s414] sm:$0xff]
    %v417 = vsel %vm157, %v412, 0
    %v420 = vsel %vm157, %v413, 0
    %422 = vmatprep.subr.mxu0 0.0
    %423 = vmatpush1.msra.mxu0 0.0
    %424 = vmatprep.subr.mxu0 0.0
    %425 = vmatpush1.msra.mxu0 0.0
    %426 = vmatprep.subr.mxu0 0.0
    %427 = vmatpush1.msra.mxu0 0.0
    %428 = vmatprep.subr.mxu0 0.0
    %429 = vmatpush1.msra.mxu0 0.0
    %430 = vmatprep.subr.mxu0 0.0
    %431 = vmatpush1.msra.mxu0 0.0
    %432 = vmatprep.subr.mxu0 0.0
    %433 = vmatpush1.msra.mxu0 0.0
    %434 = vmatprep.subr.mxu0 0.0
    %435 = vmatpush1.msra.mxu0 0.0
    %436 = vmatprep.subr.mxu0 0.0
    %437 = vmatpush1.msra.mxu0 0.0
    %438 = vmatprep.subr.mxu0 0.0
    %439 = vmatpush1.msra.mxu0 0.0
    %440 = vmatprep.subr.mxu0 0.0
    %441 = vmatpush1.msra.mxu0 0.0
    %442 = vmatprep.subr.mxu0 0.0
    %443 = vmatpush1.msra.mxu0 0.0
    %444 = vmatprep.subr.mxu0 0.0
    %445 = vmatpush1.msra.mxu0 0.0
    %446 = vmatprep.subr.mxu0 0.0
    %447 = vmatpush1.msra.mxu0 0.0
    %448 = vmatprep.subr.mxu0 0.0
    %449 = vmatpush1.msra.mxu0 0.0
    %450 = vmatprep.subr.mxu0 0.0
    %451 = vmatpush1.msra.mxu0 0.0
    %452 = vmatprep.subr.mxu0 0.0
    %453 = vmatpush1.msra.mxu0 %v415
    %454 = vmatprep.subr.mxu0 0.0
    %455 = vmatpush2.msra.mxu0 0.0
    %456 = vmatprep.subr.mxu0 0.0
    %457 = vmatpush2.msra.mxu0 0.0
    %458 = vmatprep.subr.mxu0 0.0
    %459 = vmatpush2.msra.mxu0 0.0
    %460 = vmatprep.subr.mxu0 0.0
    %461 = vmatpush2.msra.mxu0 0.0
    %462 = vmatprep.subr.mxu0 0.0
    %463 = vmatpush2.msra.mxu0 0.0
    %464 = vmatprep.subr.mxu0 0.0
    %465 = vmatpush2.msra.mxu0 0.0
    %466 = vmatprep.subr.mxu0 0.0
    %467 = vmatpush2.msra.mxu0 0.0
    %468 = vmatprep.subr.mxu0 0.0
    %469 = vmatpush2.msra.mxu0 0.0
    %470 = vmatprep.subr.mxu0 0.0
    %471 = vmatpush2.msra.mxu0 0.0
    %472 = vmatprep.subr.mxu0 0.0
    %473 = vmatpush2.msra.mxu0 0.0
    %474 = vmatprep.subr.mxu0 0.0
    %475 = vmatpush2.msra.mxu0 0.0
    %476 = vmatprep.subr.mxu0 0.0
    %477 = vmatpush2.msra.mxu0 0.0
    %478 = vmatprep.subr.mxu0 0.0
    %479 = vmatpush2.msra.mxu0 0.0
    %480 = vmatprep.subr.mxu0 0.0
    %481 = vmatpush2.msra.mxu0 0.0
    %482 = vmatprep.subr.mxu0 0.0
    %483 = vmatpush2.msra.mxu0 0.0
    %484 = vmatprep.subr.mxu0 0.0
    %485 = vmatpush2.msra.mxu0 0.0
    %486 = vmatprep.mubr.f32.mxu0 0.0
    %487 = vmatmul.mubr.f32.gmra.mxu0 %v417
    %v488 = vpop.f32.mrf.mxu0
    %v489 = vadd.f32 0.0, %v488
    %v490 = vpop.f32.mrf.mxu0
    %491 = vmatprep.mubr.f32.mxu0 0.0
    %492 = vmatmul.mubr.f32.gmra.mxu0 %v420
    %v493 = vpop.f32.mrf.mxu0
    %v494 = vadd.f32 0.0, %v493
    %v495 = vpop.f32.mrf.mxu0
    %496 = vdwg.mxu0
    %v497 = vadd.f32 %v410, %v489
    %v498 = vadd.f32 %v411, %v494
    %v499 = vld [vmem:[#allocation2 + $0x3] sm:$0xff]
    %v500 = vld [vmem:[#allocation2 + $0xb] sm:$0xff]
    %s501 = scalar_lea.vmem %s4, 24
    %v502 = vld [vmem:[%s501] sm:$0xff]
    %v504 = vsel %vm157, %v499, 0
    %v507 = vsel %vm157, %v500, 0
    %509 = vmatprep.subr.mxu0 0.0
    %510 = vmatpush1.msra.mxu0 0.0
    %511 = vmatprep.subr.mxu0 0.0
    %512 = vmatpush1.msra.mxu0 0.0
    %513 = vmatprep.subr.mxu0 0.0
    %514 = vmatpush1.msra.mxu0 0.0
    %515 = vmatprep.subr.mxu0 0.0
    %516 = vmatpush1.msra.mxu0 0.0
    %517 = vmatprep.subr.mxu0 0.0
    %518 = vmatpush1.msra.mxu0 0.0
    %519 = vmatprep.subr.mxu0 0.0
    %520 = vmatpush1.msra.mxu0 0.0
    %521 = vmatprep.subr.mxu0 0.0
    %522 = vmatpush1.msra.mxu0 0.0
    %523 = vmatprep.subr.mxu0 0.0
    %524 = vmatpush1.msra.mxu0 0.0
    %525 = vmatprep.subr.mxu0 0.0
    %526 = vmatpush1.msra.mxu0 0.0
    %527 = vmatprep.subr.mxu0 0.0
    %528 = vmatpush1.msra.mxu0 0.0
    %529 = vmatprep.subr.mxu0 0.0
    %530 = vmatpush1.msra.mxu0 0.0
    %531 = vmatprep.subr.mxu0 0.0
    %532 = vmatpush1.msra.mxu0 0.0
    %533 = vmatprep.subr.mxu0 0.0
    %534 = vmatpush1.msra.mxu0 0.0
    %535 = vmatprep.subr.mxu0 0.0
    %536 = vmatpush1.msra.mxu0 0.0
    %537 = vmatprep.subr.mxu0 0.0
    %538 = vmatpush1.msra.mxu0 0.0
    %539 = vmatprep.subr.mxu0 0.0
    %540 = vmatpush1.msra.mxu0 %v502
    %541 = vmatprep.subr.mxu0 0.0
    %542 = vmatpush2.msra.mxu0 0.0
    %543 = vmatprep.subr.mxu0 0.0
    %544 = vmatpush2.msra.mxu0 0.0
    %545 = vmatprep.subr.mxu0 0.0
    %546 = vmatpush2.msra.mxu0 0.0
    %547 = vmatprep.subr.mxu0 0.0
    %548 = vmatpush2.msra.mxu0 0.0
    %549 = vmatprep.subr.mxu0 0.0
    %550 = vmatpush2.msra.mxu0 0.0
    %551 = vmatprep.subr.mxu0 0.0
    %552 = vmatpush2.msra.mxu0 0.0
    %553 = vmatprep.subr.mxu0 0.0
    %554 = vmatpush2.msra.mxu0 0.0
    %555 = vmatprep.subr.mxu0 0.0
    %556 = vmatpush2.msra.mxu0 0.0
    %557 = vmatprep.subr.mxu0 0.0
    %558 = vmatpush2.msra.mxu0 0.0
    %559 = vmatprep.subr.mxu0 0.0
    %560 = vmatpush2.msra.mxu0 0.0
    %561 = vmatprep.subr.mxu0 0.0
    %562 = vmatpush2.msra.mxu0 0.0
    %563 = vmatprep.subr.mxu0 0.0
    %564 = vmatpush2.msra.mxu0 0.0
    %565 = vmatprep.subr.mxu0 0.0
    %566 = vmatpush2.msra.mxu0 0.0
    %567 = vmatprep.subr.mxu0 0.0
    %568 = vmatpush2.msra.mxu0 0.0
    %569 = vmatprep.subr.mxu0 0.0
    %570 = vmatpush2.msra.mxu0 0.0
    %571 = vmatprep.subr.mxu0 0.0
    %572 = vmatpush2.msra.mxu0 0.0
    %573 = vmatprep.mubr.f32.mxu0 0.0
    %574 = vmatmul.mubr.f32.gmra.mxu0 %v504
    %v575 = vpop.f32.mrf.mxu0
    %v576 = vadd.f32 0.0, %v575
    %v577 = vpop.f32.mrf.mxu0
    %578 = vmatprep.mubr.f32.mxu0 0.0
    %579 = vmatmul.mubr.f32.gmra.mxu0 %v507
    %v580 = vpop.f32.mrf.mxu0
    %v581 = vadd.f32 0.0, %v580
    %v582 = vpop.f32.mrf.mxu0
    %583 = vdwg.mxu0
    %v584 = vadd.f32 %v497, %v576
    %v585 = vadd.f32 %v498, %v581
    %v586 = vld [vmem:[#allocation2 + $0x4] sm:$0xff]
    %v587 = vld [vmem:[#allocation2 + $0xc] sm:$0xff]
    %s588 = scalar_lea.vmem %s4, 32
    %v589 = vld [vmem:[%s588] sm:$0xff]
    %v591 = vsel %vm157, %v586, 0
    %v594 = vsel %vm157, %v587, 0
    %596 = vmatprep.subr.mxu0 0.0
    %597 = vmatpush1.msra.mxu0 0.0
    %598 = vmatprep.subr.mxu0 0.0
    %599 = vmatpush1.msra.mxu0 0.0
    %600 = vmatprep.subr.mxu0 0.0
    %601 = vmatpush1.msra.mxu0 0.0
    %602 = vmatprep.subr.mxu0 0.0
    %603 = vmatpush1.msra.mxu0 0.0
    %604 = vmatprep.subr.mxu0 0.0
    %605 = vmatpush1.msra.mxu0 0.0
    %606 = vmatprep.subr.mxu0 0.0
    %607 = vmatpush1.msra.mxu0 0.0
    %608 = vmatprep.subr.mxu0 0.0
    %609 = vmatpush1.msra.mxu0 0.0
    %610 = vmatprep.subr.mxu0 0.0
    %611 = vmatpush1.msra.mxu0 0.0
    %612 = vmatprep.subr.mxu0 0.0
    %613 = vmatpush1.msra.mxu0 0.0
    %614 = vmatprep.subr.mxu0 0.0
    %615 = vmatpush1.msra.mxu0 0.0
    %616 = vmatprep.subr.mxu0 0.0
    %617 = vmatpush1.msra.mxu0 0.0
    %618 = vmatprep.subr.mxu0 0.0
    %619 = vmatpush1.msra.mxu0 0.0
    %620 = vmatprep.subr.mxu0 0.0
    %621 = vmatpush1.msra.mxu0 0.0
    %622 = vmatprep.subr.mxu0 0.0
    %623 = vmatpush1.msra.mxu0 0.0
    %624 = vmatprep.subr.mxu0 0.0
    %625 = vmatpush1.msra.mxu0 0.0
    %626 = vmatprep.subr.mxu0 0.0
    %627 = vmatpush1.msra.mxu0 %v589
    %628 = vmatprep.subr.mxu0 0.0
    %629 = vmatpush2.msra.mxu0 0.0
    %630 = vmatprep.subr.mxu0 0.0
    %631 = vmatpush2.msra.mxu0 0.0
    %632 = vmatprep.subr.mxu0 0.0
    %633 = vmatpush2.msra.mxu0 0.0
    %634 = vmatprep.subr.mxu0 0.0
    %635 = vmatpush2.msra.mxu0 0.0
    %636 = vmatprep.subr.mxu0 0.0
    %637 = vmatpush2.msra.mxu0 0.0
    %638 = vmatprep.subr.mxu0 0.0
    %639 = vmatpush2.msra.mxu0 0.0
    %640 = vmatprep.subr.mxu0 0.0
    %641 = vmatpush2.msra.mxu0 0.0
    %642 = vmatprep.subr.mxu0 0.0
    %643 = vmatpush2.msra.mxu0 0.0
    %644 = vmatprep.subr.mxu0 0.0
    %645 = vmatpush2.msra.mxu0 0.0
    %646 = vmatprep.subr.mxu0 0.0
    %647 = vmatpush2.msra.mxu0 0.0
    %648 = vmatprep.subr.mxu0 0.0
    %649 = vmatpush2.msra.mxu0 0.0
    %650 = vmatprep.subr.mxu0 0.0
    %651 = vmatpush2.msra.mxu0 0.0
    %652 = vmatprep.subr.mxu0 0.0
    %653 = vmatpush2.msra.mxu0 0.0
    %654 = vmatprep.subr.mxu0 0.0
    %655 = vmatpush2.msra.mxu0 0.0
    %656 = vmatprep.subr.mxu0 0.0
    %657 = vmatpush2.msra.mxu0 0.0
    %658 = vmatprep.subr.mxu0 0.0
    %659 = vmatpush2.msra.mxu0 0.0
    %660 = vmatprep.mubr.f32.mxu0 0.0
    %661 = vmatmul.mubr.f32.gmra.mxu0 %v591
    %v662 = vpop.f32.mrf.mxu0
    %v663 = vadd.f32 0.0, %v662
    %v664 = vpop.f32.mrf.mxu0
    %665 = vmatprep.mubr.f32.mxu0 0.0
    %666 = vmatmul.mubr.f32.gmra.mxu0 %v594
    %v667 = vpop.f32.mrf.mxu0
    %v668 = vadd.f32 0.0, %v667
    %v669 = vpop.f32.mrf.mxu0
    %670 = vdwg.mxu0
    %v671 = vadd.f32 %v584, %v663
    %v672 = vadd.f32 %v585, %v668
    %v673 = vsel %vm157, %v671, 0.0
    %v674 = vsel %vm157, %v672, 0.0
    %v675 = vadd.f32 %v673, %v674
    %v676 = vrot.slane %v675, 4
    %v677 = vadd.f32 %v675, %v676
    %v678 = vrot.slane %v677, 2
    %v679 = vadd.f32 %v677, %v678
    %v680 = vrot.slane %v679, 1
    %v681 = vadd.f32 %v679, %v680
    %v682 = vmul.f32 %v681, %v167
    %v683 = vsub.f32 %v671, %v682
    %v684 = vsub.f32 %v672, %v682
    %v685 = vmul.f32 %v683, %v683
    %v686 = vmul.f32 %v684, %v684
    %v687 = vsel %vm157, %v685, 0.0
    %v688 = vsel %vm157, %v686, 0.0
    %v689 = vadd.f32 %v687, %v688
    %v690 = vrot.slane %v689, 4
    %v691 = vadd.f32 %v689, %v690
    %v692 = vrot.slane %v691, 2
    %v693 = vadd.f32 %v691, %v692
    %v694 = vrot.slane %v693, 1
    %v695 = vadd.f32 %v693, %v694
    %v696 = vmul.f32 %v695, %v167
    %v697 = vadd.f32 %v696, 1e-05
    %v698 = vrsqrt.pop %v697
    %v699 = vmul.f32 %v683, %v698
    %v700 = vmul.f32 %v684, %v698
    %v701 = vlaneseq
    %v702 = vshrl.u32 %v701, 7
    %v703 = vsub.s32 0, %v702
    %v704 = vrot.slane %v59, %v703
    %v705 = vmul.f32 %v699, %v704
    %v706 = vmul.f32 %v700, %v704
    %v707 = vlaneseq
    %v708 = vshrl.u32 %v707, 7
    %v709 = vsub.s32 0, %v708
    %v710 = vrot.slane %v60, %v709
    %v711 = vadd.f32 %v705, %v710
    %v712 = vadd.f32 %v706, %v710
    %v713 = vmin.f32 %v711, 20.0
    %v714 = vmin.f32 %v712, 20.0
    %v715 = vmul.f32 %v713, 1.442695
    %v716 = vpow.pop %v715
    %v717 = vmul.f32 %v714, 1.442695
    %v718 = vpow.pop %v717
    %v719 = vadd.f32 %v716, 1.0
    %v720 = vadd.f32 %v718, 1.0
    %v721 = vmul.f32 %v719, %v719
    %v722 = vmul.f32 %v720, %v720
    %vm723 = vcmp.gt.f32.partialorder %v711, 20.0
    %vm724 = vcmp.gt.f32.partialorder %v712, 20.0
    %v725 = vsub.f32 %v721, 1.0
    %v726 = vsub.f32 %v722, 1.0
    %v727 = vmul.f32 %v711, %v725
    %v728 = vmul.f32 %v712, %v726
    %v729 = vadd.f32 %v721, 1.0
    %v730 = vadd.f32 %v722, 1.0
    %v731 = vrcp.pop %v729
    %v732 = vmul.f32 %v727, %v731
    %v733 = vrcp.pop %v730
    %v734 = vmul.f32 %v728, %v733
    %v735 = vsel %vm723, %v711, %v732
    %v736 = vsel %vm724, %v712, %v734
    %v737 = vld [vmem:[%s0] sm:$0xff]
    %v738 = vld [vmem:[%s0 + $0x8] sm:$0xff]
    %v739 = vld [vmem:[#allocation5] sm:$0xf]
    %v740 = vlaneseq
    %v741 = vshrl.u32 %v740, 7
    %v742 = vsub.s32 0, %v741
    %v743 = vrot.slane %v61, %v742
    %vm744 = vcmask 31744
    %v746 = vsel %vm744, %v737, 0
    %v749 = vsel %vm744, %v738, 0
    %v752 = vsel %vm78, %v739, 0
    %754 = vmatprep.subr.mxu0 0.0
    %755 = vmatpush1.msra.mxu0 0.0
    %756 = vmatprep.subr.mxu0 0.0
    %757 = vmatpush1.msra.mxu0 0.0
    %758 = vmatprep.subr.mxu0 0.0
    %759 = vmatpush1.msra.mxu0 0.0
    %760 = vmatprep.subr.mxu0 0.0
    %761 = vmatpush1.msra.mxu0 0.0
    %762 = vmatprep.subr.mxu0 0.0
    %763 = vmatpush1.msra.mxu0 0.0
    %764 = vmatprep.subr.mxu0 0.0
    %765 = vmatpush1.msra.mxu0 0.0
    %766 = vmatprep.subr.mxu0 0.0
    %767 = vmatpush1.msra.mxu0 0.0
    %768 = vmatprep.subr.mxu0 0.0
    %769 = vmatpush1.msra.mxu0 0.0
    %770 = vmatprep.subr.mxu0 0.0
    %771 = vmatpush1.msra.mxu0 0.0
    %772 = vmatprep.subr.mxu0 0.0
    %773 = vmatpush1.msra.mxu0 0.0
    %774 = vmatprep.subr.mxu0 0.0
    %775 = vmatpush1.msra.mxu0 0.0
    %776 = vmatprep.subr.mxu0 0.0
    %777 = vmatpush1.msra.mxu0 0.0
    %778 = vmatprep.subr.mxu0 0.0
    %779 = vmatpush1.msra.mxu0 0.0
    %780 = vmatprep.subr.mxu0 0.0
    %781 = vmatpush1.msra.mxu0 0.0
    %782 = vmatprep.subr.mxu0 0.0
    %783 = vmatpush1.msra.mxu0 0.0
    %784 = vmatprep.subr.mxu0 0.0
    %785 = vmatpush1.msra.mxu0 %v752
    %786 = vmatprep.subr.mxu0 0.0
    %787 = vmatpush2.msra.mxu0 0.0
    %788 = vmatprep.subr.mxu0 0.0
    %789 = vmatpush2.msra.mxu0 0.0
    %790 = vmatprep.subr.mxu0 0.0
    %791 = vmatpush2.msra.mxu0 0.0
    %792 = vmatprep.subr.mxu0 0.0
    %793 = vmatpush2.msra.mxu0 0.0
    %794 = vmatprep.subr.mxu0 0.0
    %795 = vmatpush2.msra.mxu0 0.0
    %796 = vmatprep.subr.mxu0 0.0
    %797 = vmatpush2.msra.mxu0 0.0
    %798 = vmatprep.subr.mxu0 0.0
    %799 = vmatpush2.msra.mxu0 0.0
    %800 = vmatprep.subr.mxu0 0.0
    %801 = vmatpush2.msra.mxu0 0.0
    %802 = vmatprep.subr.mxu0 0.0
    %803 = vmatpush2.msra.mxu0 0.0
    %804 = vmatprep.subr.mxu0 0.0
    %805 = vmatpush2.msra.mxu0 0.0
    %806 = vmatprep.subr.mxu0 0.0
    %807 = vmatpush2.msra.mxu0 0.0
    %808 = vmatprep.subr.mxu0 0.0
    %809 = vmatpush2.msra.mxu0 0.0
    %810 = vmatprep.subr.mxu0 0.0
    %811 = vmatpush2.msra.mxu0 0.0
    %812 = vmatprep.subr.mxu0 0.0
    %813 = vmatpush2.msra.mxu0 0.0
    %814 = vmatprep.subr.mxu0 0.0
    %815 = vmatpush2.msra.mxu0 0.0
    %816 = vmatprep.subr.mxu0 0.0
    %817 = vmatpush2.msra.mxu0 0.0
    %818 = vmatprep.mubr.f32.mxu0 0.0
    %819 = vmatmul.mubr.f32.gmra.mxu0 %v746
    %v820 = vpop.f32.mrf.mxu0
    %v821 = vadd.f32 %v743, %v820
    %v822 = vpop.f32.mrf.mxu0
    %823 = vmatprep.mubr.f32.mxu0 0.0
    %824 = vmatmul.mubr.f32.gmra.mxu0 %v749
    %v825 = vpop.f32.mrf.mxu0
    %v826 = vadd.f32 %v743, %v825
    %v827 = vpop.f32.mrf.mxu0
    %828 = vdwg.mxu0
    %v829 = vadd.f32 %v735, %v821
    %v830 = vadd.f32 %v736, %v826
    %831 = vst.msk [vmem:[%s7] sm:$0xff] %vm157, %v829
    %832 = vst.msk [vmem:[%s7 + $0x8] sm:$0xff] %vm157, %v830
    %s833 = scalar_lea.vmem %s1, 16
    %v834 = vld [vmem:[%s833] sm:$0xff]
    %v835 = vld [vmem:[%s833 + $0x8] sm:$0xff]
    %v836 = vld [vmem:[%s3] sm:$0xff]
    %v837 = vld [vmem:[%s3 + $0x8] sm:$0xff]
    %v838 = vld [vmem:[%s3 + $0x10] sm:$0xf]
    %v840 = vsel %vm71, %v834, 0
    %v843 = vsel %vm71, %v835, 0
    %v846 = vsel %vm78, %v838, 0
    %848 = vmatprep.subr.mxu0 0.0
    %849 = vmatpush1.msra.mxu0 0.0
    %850 = vmatprep.subr.mxu0 0.0
    %851 = vmatpush1.msra.mxu0 0.0
    %852 = vmatprep.subr.mxu0 0.0
    %853 = vmatpush1.msra.mxu0 0.0
    %854 = vmatprep.subr.mxu0 0.0
    %855 = vmatpush1.msra.mxu0 0.0
    %856 = vmatprep.subr.mxu0 0.0
    %857 = vmatpush1.msra.mxu0 0.0
    %858 = vmatprep.subr.mxu0 0.0
    %859 = vmatpush1.msra.mxu0 0.0
    %860 = vmatprep.subr.mxu0 0.0
    %861 = vmatpush1.msra.mxu0 0.0
    %862 = vmatprep.subr.mxu0 0.0
    %863 = vmatpush1.msra.mxu0 0.0
    %864 = vmatprep.subr.mxu0 0.0
    %865 = vmatpush1.msra.mxu0 0.0
    %866 = vmatprep.subr.mxu0 0.0
    %867 = vmatpush1.msra.mxu0 0.0
    %868 = vmatprep.subr.mxu0 0.0
    %869 = vmatpush1.msra.mxu0 0.0
    %870 = vmatprep.subr.mxu0 0.0
    %871 = vmatpush1.msra.mxu0 0.0
    %872 = vmatprep.subr.mxu0 0.0
    %873 = vmatpush1.msra.mxu0 0.0
    %874 = vmatprep.subr.mxu0 0.0
    %875 = vmatpush1.msra.mxu0 %v846
    %876 = vmatprep.subr.mxu0 0.0
    %877 = vmatpush1.msra.mxu0 %v837
    %878 = vmatprep.subr.mxu0 0.0
    %879 = vmatpush1.msra.mxu0 %v836
    %880 = vmatprep.subr.mxu0 0.0
    %881 = vmatpush2.msra.mxu0 0.0
    %882 = vmatprep.subr.mxu0 0.0
    %883 = vmatpush2.msra.mxu0 0.0
    %884 = vmatprep.subr.mxu0 0.0
    %885 = vmatpush2.msra.mxu0 0.0
    %886 = vmatprep.subr.mxu0 0.0
    %887 = vmatpush2.msra.mxu0 0.0
    %888 = vmatprep.subr.mxu0 0.0
    %889 = vmatpush2.msra.mxu0 0.0
    %890 = vmatprep.subr.mxu0 0.0
    %891 = vmatpush2.msra.mxu0 0.0
    %892 = vmatprep.subr.mxu0 0.0
    %893 = vmatpush2.msra.mxu0 0.0
    %894 = vmatprep.subr.mxu0 0.0
    %895 = vmatpush2.msra.mxu0 0.0
    %896 = vmatprep.subr.mxu0 0.0
    %897 = vmatpush2.msra.mxu0 0.0
    %898 = vmatprep.subr.mxu0 0.0
    %899 = vmatpush2.msra.mxu0 0.0
    %900 = vmatprep.subr.mxu0 0.0
    %901 = vmatpush2.msra.mxu0 0.0
    %902 = vmatprep.subr.mxu0 0.0
    %903 = vmatpush2.msra.mxu0 0.0
    %904 = vmatprep.subr.mxu0 0.0
    %905 = vmatpush2.msra.mxu0 0.0
    %906 = vmatprep.subr.mxu0 0.0
    %907 = vmatpush2.msra.mxu0 0.0
    %908 = vmatprep.subr.mxu0 0.0
    %909 = vmatpush2.msra.mxu0 0.0
    %910 = vmatprep.subr.mxu0 0.0
    %911 = vmatpush2.msra.mxu0 0.0
    %912 = vmatprep.mubr.f32.mxu0 0.0
    %913 = vmatmul.mubr.f32.gmra.mxu0 %v840
    %v914 = vpop.f32.mrf.mxu0
    %v915 = vadd.f32 %v70, %v914
    %v916 = vpop.f32.mrf.mxu0
    %917 = vmatprep.mubr.f32.mxu0 0.0
    %918 = vmatmul.mubr.f32.gmra.mxu0 %v843
    %v919 = vpop.f32.mrf.mxu0
    %v920 = vadd.f32 %v70, %v919
    %v921 = vpop.f32.mrf.mxu0
    %922 = vdwg.mxu0
    %v923 = vsel %vm157, %v915, 0.0
    %v924 = vsel %vm157, %v920, 0.0
    %v925 = vadd.f32 %v923, %v924
    %v926 = vrot.slane %v925, 4
    %v927 = vadd.f32 %v925, %v926
    %v928 = vrot.slane %v927, 2
    %v929 = vadd.f32 %v927, %v928
    %v930 = vrot.slane %v929, 1
    %v931 = vadd.f32 %v929, %v930
    %v932 = vmul.f32 %v931, %v167
    %v933 = vsub.f32 %v915, %v932
    %v934 = vsub.f32 %v920, %v932
    %v935 = vmul.f32 %v933, %v933
    %v936 = vmul.f32 %v934, %v934
    %v937 = vsel %vm157, %v935, 0.0
    %v938 = vsel %vm157, %v936, 0.0
    %v939 = vadd.f32 %v937, %v938
    %v940 = vrot.slane %v939, 4
    %v941 = vadd.f32 %v939, %v940
    %v942 = vrot.slane %v941, 2
    %v943 = vadd.f32 %v941, %v942
    %v944 = vrot.slane %v943, 1
    %v945 = vadd.f32 %v943, %v944
    %v946 = vmul.f32 %v945, %v167
    %v947 = vadd.f32 %v946, 1e-05
    %v948 = vrsqrt.pop %v947
    %v949 = vmul.f32 %v933, %v948
    %v950 = vmul.f32 %v934, %v948
    %v951 = vmul.f32 %v949, %v190
    %v952 = vmul.f32 %v950, %v190
    %v953 = vadd.f32 %v951, %v196
    %v954 = vadd.f32 %v952, %v196
    %v955 = vmin.f32 %v953, 20.0
    %v956 = vmin.f32 %v954, 20.0
    %v957 = vmul.f32 %v955, 1.442695
    %v958 = vpow.pop %v957
    %v959 = vmul.f32 %v956, 1.442695
    %v960 = vpow.pop %v959
    %v961 = vadd.f32 %v958, 1.0
    %v962 = vadd.f32 %v960, 1.0
    %v963 = vmul.f32 %v961, %v961
    %v964 = vmul.f32 %v962, %v962
    %vm965 = vcmp.gt.f32.partialorder %v953, 20.0
    %vm966 = vcmp.gt.f32.partialorder %v954, 20.0
    %v967 = vsub.f32 %v963, 1.0
    %v968 = vsub.f32 %v964, 1.0
    %v969 = vmul.f32 %v953, %v967
    %v970 = vmul.f32 %v954, %v968
    %v971 = vadd.f32 %v963, 1.0
    %v972 = vadd.f32 %v964, 1.0
    %v973 = vrcp.pop %v971
    %v974 = vmul.f32 %v969, %v973
    %v975 = vrcp.pop %v972
    %v976 = vmul.f32 %v970, %v975
    %v977 = vsel %vm965, %v953, %v974
    %v978 = vsel %vm966, %v954, %v976
    %s979 = scalar_lea.vmem [#allocation3], 1
    %v980 = vld [vmem:[%s979] sm:$0x1]
    %v982 = vlaneseq
    %v983 = vshrl.u32 %v982, 7
    %v984 = vsub.s32 0, %v983
    %v985 = vrot.slane %v980, %v984
    %v987 = vadd.f32 %v977, %v985
    %v988 = vadd.f32 %v978, %v985
    %989 = vst.msk [vmem:[#allocation2 + $0x2] sm:$0xff] %vm157, %v987
    %990 = vst.msk [vmem:[#allocation2 + $0xa] sm:$0xff] %vm157, %v988
    %v991 = vld [vmem:[#allocation2] sm:$0xff]
    %v992 = vld [vmem:[#allocation2 + $0x8] sm:$0xff]
    %v993 = vld [vmem:[%s4] sm:$0xff]
    %v995 = vsel %vm157, %v991, 0
    %v998 = vsel %vm157, %v992, 0
    %1000 = vmatprep.subr.mxu0 0.0
    %1001 = vmatpush1.msra.mxu0 0.0
    %1002 = vmatprep.subr.mxu0 0.0
    %1003 = vmatpush1.msra.mxu0 0.0
    %1004 = vmatprep.subr.mxu0 0.0
    %1005 = vmatpush1.msra.mxu0 0.0
    %1006 = vmatprep.subr.mxu0 0.0
    %1007 = vmatpush1.msra.mxu0 0.0
    %1008 = vmatprep.subr.mxu0 0.0
    %1009 = vmatpush1.msra.mxu0 0.0
    %1010 = vmatprep.subr.mxu0 0.0
    %1011 = vmatpush1.msra.mxu0 0.0
    %1012 = vmatprep.subr.mxu0 0.0
    %1013 = vmatpush1.msra.mxu0 0.0
    %1014 = vmatprep.subr.mxu0 0.0
    %1015 = vmatpush1.msra.mxu0 0.0
    %1016 = vmatprep.subr.mxu0 0.0
    %1017 = vmatpush1.msra.mxu0 0.0
    %1018 = vmatprep.subr.mxu0 0.0
    %1019 = vmatpush1.msra.mxu0 0.0
    %1020 = vmatprep.subr.mxu0 0.0
    %1021 = vmatpush1.msra.mxu0 0.0
    %1022 = vmatprep.subr.mxu0 0.0
    %1023 = vmatpush1.msra.mxu0 0.0
    %1024 = vmatprep.subr.mxu0 0.0
    %1025 = vmatpush1.msra.mxu0 0.0
    %1026 = vmatprep.subr.mxu0 0.0
    %1027 = vmatpush1.msra.mxu0 0.0
    %1028 = vmatprep.subr.mxu0 0.0
    %1029 = vmatpush1.msra.mxu0 0.0
    %1030 = vmatprep.subr.mxu0 0.0
    %1031 = vmatpush1.msra.mxu0 %v993
    %1032 = vmatprep.subr.mxu0 0.0
    %1033 = vmatpush2.msra.mxu0 0.0
    %1034 = vmatprep.subr.mxu0 0.0
    %1035 = vmatpush2.msra.mxu0 0.0
    %1036 = vmatprep.subr.mxu0 0.0
    %1037 = vmatpush2.msra.mxu0 0.0
    %1038 = vmatprep.subr.mxu0 0.0
    %1039 = vmatpush2.msra.mxu0 0.0
    %1040 = vmatprep.subr.mxu0 0.0
    %1041 = vmatpush2.msra.mxu0 0.0
    %1042 = vmatprep.subr.mxu0 0.0
    %1043 = vmatpush2.msra.mxu0 0.0
    %1044 = vmatprep.subr.mxu0 0.0
    %1045 = vmatpush2.msra.mxu0 0.0
    %1046 = vmatprep.subr.mxu0 0.0
    %1047 = vmatpush2.msra.mxu0 0.0
    %1048 = vmatprep.subr.mxu0 0.0
    %1049 = vmatpush2.msra.mxu0 0.0
    %1050 = vmatprep.subr.mxu0 0.0
    %1051 = vmatpush2.msra.mxu0 0.0
    %1052 = vmatprep.subr.mxu0 0.0
    %1053 = vmatpush2.msra.mxu0 0.0
    %1054 = vmatprep.subr.mxu0 0.0
    %1055 = vmatpush2.msra.mxu0 0.0
    %1056 = vmatprep.subr.mxu0 0.0
    %1057 = vmatpush2.msra.mxu0 0.0
    %1058 = vmatprep.subr.mxu0 0.0
    %1059 = vmatpush2.msra.mxu0 0.0
    %1060 = vmatprep.subr.mxu0 0.0
    %1061 = vmatpush2.msra.mxu0 0.0
    %1062 = vmatprep.subr.mxu0 0.0
    %1063 = vmatpush2.msra.mxu0 0.0
    %1064 = vmatprep.mubr.f32.mxu0 0.0
    %1065 = vmatmul.mubr.f32.gmra.mxu0 %v995
    %v1066 = vpop.f32.mrf.mxu0
    %v1067 = vadd.f32 0.0, %v1066
    %v1068 = vpop.f32.mrf.mxu0
    %1069 = vmatprep.mubr.f32.mxu0 0.0
    %1070 = vmatmul.mubr.f32.gmra.mxu0 %v998
    %v1071 = vpop.f32.mrf.mxu0
    %v1072 = vadd.f32 0.0, %v1071
    %v1073 = vpop.f32.mrf.mxu0
    %1074 = vdwg.mxu0
    %v1075 = vadd.f32 %v238, %v1067
    %v1076 = vadd.f32 %v238, %v1072
    %v1077 = vld [vmem:[#allocation2 + $0x1] sm:$0xff]
    %v1078 = vld [vmem:[#allocation2 + $0x9] sm:$0xff]
    %v1079 = vld [vmem:[%s327] sm:$0xff]
    %v1081 = vsel %vm157, %v1077, 0
    %v1084 = vsel %vm157, %v1078, 0
    %1086 = vmatprep.subr.mxu0 0.0
    %1087 = vmatpush1.msra.mxu0 0.0
    %1088 = vmatprep.subr.mxu0 0.0
    %1089 = vmatpush1.msra.mxu0 0.0
    %1090 = vmatprep.subr.mxu0 0.0
    %1091 = vmatpush1.msra.mxu0 0.0
    %1092 = vmatprep.subr.mxu0 0.0
    %1093 = vmatpush1.msra.mxu0 0.0
    %1094 = vmatprep.subr.mxu0 0.0
    %1095 = vmatpush1.msra.mxu0 0.0
    %1096 = vmatprep.subr.mxu0 0.0
    %1097 = vmatpush1.msra.mxu0 0.0
    %1098 = vmatprep.subr.mxu0 0.0
    %1099 = vmatpush1.msra.mxu0 0.0
    %1100 = vmatprep.subr.mxu0 0.0
    %1101 = vmatpush1.msra.mxu0 0.0
    %1102 = vmatprep.subr.mxu0 0.0
    %1103 = vmatpush1.msra.mxu0 0.0
    %1104 = vmatprep.subr.mxu0 0.0
    %1105 = vmatpush1.msra.mxu0 0.0
    %1106 = vmatprep.subr.mxu0 0.0
    %1107 = vmatpush1.msra.mxu0 0.0
    %1108 = vmatprep.subr.mxu0 0.0
    %1109 = vmatpush1.msra.mxu0 0.0
    %1110 = vmatprep.subr.mxu0 0.0
    %1111 = vmatpush1.msra.mxu0 0.0
    %1112 = vmatprep.subr.mxu0 0.0
    %1113 = vmatpush1.msra.mxu0 0.0
    %1114 = vmatprep.subr.mxu0 0.0
    %1115 = vmatpush1.msra.mxu0 0.0
    %1116 = vmatprep.subr.mxu0 0.0
    %1117 = vmatpush1.msra.mxu0 %v1079
    %1118 = vmatprep.subr.mxu0 0.0
    %1119 = vmatpush2.msra.mxu0 0.0
    %1120 = vmatprep.subr.mxu0 0.0
    %1121 = vmatpush2.msra.mxu0 0.0
    %1122 = vmatprep.subr.mxu0 0.0
    %1123 = vmatpush2.msra.mxu0 0.0
    %1124 = vmatprep.subr.mxu0 0.0
    %1125 = vmatpush2.msra.mxu0 0.0
    %1126 = vmatprep.subr.mxu0 0.0
    %1127 = vmatpush2.msra.mxu0 0.0
    %1128 = vmatprep.subr.mxu0 0.0
    %1129 = vmatpush2.msra.mxu0 0.0
    %1130 = vmatprep.subr.mxu0 0.0
    %1131 = vmatpush2.msra.mxu0 0.0
    %1132 = vmatprep.subr.mxu0 0.0
    %1133 = vmatpush2.msra.mxu0 0.0
    %1134 = vmatprep.subr.mxu0 0.0
    %1135 = vmatpush2.msra.mxu0 0.0
    %1136 = vmatprep.subr.mxu0 0.0
    %1137 = vmatpush2.msra.mxu0 0.0
    %1138 = vmatprep.subr.mxu0 0.0
    %1139 = vmatpush2.msra.mxu0 0.0
    %1140 = vmatprep.subr.mxu0 0.0
    %1141 = vmatpush2.msra.mxu0 0.0
    %1142 = vmatprep.subr.mxu0 0.0
    %1143 = vmatpush2.msra.mxu0 0.0
    %1144 = vmatprep.subr.mxu0 0.0
    %1145 = vmatpush2.msra.mxu0 0.0
    %1146 = vmatprep.subr.mxu0 0.0
    %1147 = vmatpush2.msra.mxu0 0.0
    %1148 = vmatprep.subr.mxu0 0.0
    %1149 = vmatpush2.msra.mxu0 0.0
    %1150 = vmatprep.mubr.f32.mxu0 0.0
    %1151 = vmatmul.mubr.f32.gmra.mxu0 %v1081
    %v1152 = vpop.f32.mrf.mxu0
    %v1153 = vadd.f32 0.0, %v1152
    %v1154 = vpop.f32.mrf.mxu0
    %1155 = vmatprep.mubr.f32.mxu0 0.0
    %1156 = vmatmul.mubr.f32.gmra.mxu0 %v1084
    %v1157 = vpop.f32.mrf.mxu0
    %v1158 = vadd.f32 0.0, %v1157
    %v1159 = vpop.f32.mrf.mxu0
    %1160 = vdwg.mxu0
    %v1161 = vadd.f32 %v1075, %v1153
    %v1162 = vadd.f32 %v1076, %v1158
    %v1163 = vld [vmem:[#allocation2 + $0x2] sm:$0xff]
    %v1164 = vld [vmem:[#allocation2 + $0xa] sm:$0xff]
    %v1165 = vld [vmem:[%s414] sm:$0xff]
    %v1167 = vsel %vm157, %v1163, 0
    %v1170 = vsel %vm157, %v1164, 0
    %1172 = vmatprep.subr.mxu0 0.0
    %1173 = vmatpush1.msra.mxu0 0.0
    %1174 = vmatprep.subr.mxu0 0.0
    %1175 = vmatpush1.msra.mxu0 0.0
    %1176 = vmatprep.subr.mxu0 0.0
    %1177 = vmatpush1.msra.mxu0 0.0
    %1178 = vmatprep.subr.mxu0 0.0
    %1179 = vmatpush1.msra.mxu0 0.0
    %1180 = vmatprep.subr.mxu0 0.0
    %1181 = vmatpush1.msra.mxu0 0.0
    %1182 = vmatprep.subr.mxu0 0.0
    %1183 = vmatpush1.msra.mxu0 0.0
    %1184 = vmatprep.subr.mxu0 0.0
    %1185 = vmatpush1.msra.mxu0 0.0
    %1186 = vmatprep.subr.mxu0 0.0
    %1187 = vmatpush1.msra.mxu0 0.0
    %1188 = vmatprep.subr.mxu0 0.0
    %1189 = vmatpush1.msra.mxu0 0.0
    %1190 = vmatprep.subr.mxu0 0.0
    %1191 = vmatpush1.msra.mxu0 0.0
    %1192 = vmatprep.subr.mxu0 0.0
    %1193 = vmatpush1.msra.mxu0 0.0
    %1194 = vmatprep.subr.mxu0 0.0
    %1195 = vmatpush1.msra.mxu0 0.0
    %1196 = vmatprep.subr.mxu0 0.0
    %1197 = vmatpush1.msra.mxu0 0.0
    %1198 = vmatprep.subr.mxu0 0.0
    %1199 = vmatpush1.msra.mxu0 0.0
    %1200 = vmatprep.subr.mxu0 0.0
    %1201 = vmatpush1.msra.mxu0 0.0
    %1202 = vmatprep.subr.mxu0 0.0
    %1203 = vmatpush1.msra.mxu0 %v1165
    %1204 = vmatprep.subr.mxu0 0.0
    %1205 = vmatpush2.msra.mxu0 0.0
    %1206 = vmatprep.subr.mxu0 0.0
    %1207 = vmatpush2.msra.mxu0 0.0
    %1208 = vmatprep.subr.mxu0 0.0
    %1209 = vmatpush2.msra.mxu0 0.0
    %1210 = vmatprep.subr.mxu0 0.0
    %1211 = vmatpush2.msra.mxu0 0.0
    %1212 = vmatprep.subr.mxu0 0.0
    %1213 = vmatpush2.msra.mxu0 0.0
    %1214 = vmatprep.subr.mxu0 0.0
    %1215 = vmatpush2.msra.mxu0 0.0
    %1216 = vmatprep.subr.mxu0 0.0
    %1217 = vmatpush2.msra.mxu0 0.0
    %1218 = vmatprep.subr.mxu0 0.0
    %1219 = vmatpush2.msra.mxu0 0.0
    %1220 = vmatprep.subr.mxu0 0.0
    %1221 = vmatpush2.msra.mxu0 0.0
    %1222 = vmatprep.subr.mxu0 0.0
    %1223 = vmatpush2.msra.mxu0 0.0
    %1224 = vmatprep.subr.mxu0 0.0
    %1225 = vmatpush2.msra.mxu0 0.0
    %1226 = vmatprep.subr.mxu0 0.0
    %1227 = vmatpush2.msra.mxu0 0.0
    %1228 = vmatprep.subr.mxu0 0.0
    %1229 = vmatpush2.msra.mxu0 0.0
    %1230 = vmatprep.subr.mxu0 0.0
    %1231 = vmatpush2.msra.mxu0 0.0
    %1232 = vmatprep.subr.mxu0 0.0
    %1233 = vmatpush2.msra.mxu0 0.0
    %1234 = vmatprep.subr.mxu0 0.0
    %1235 = vmatpush2.msra.mxu0 0.0
    %1236 = vmatprep.mubr.f32.mxu0 0.0
    %1237 = vmatmul.mubr.f32.gmra.mxu0 %v1167
    %v1238 = vpop.f32.mrf.mxu0
    %v1239 = vadd.f32 0.0, %v1238
    %v1240 = vpop.f32.mrf.mxu0
    %1241 = vmatprep.mubr.f32.mxu0 0.0
    %1242 = vmatmul.mubr.f32.gmra.mxu0 %v1170
    %v1243 = vpop.f32.mrf.mxu0
    %v1244 = vadd.f32 0.0, %v1243
    %v1245 = vpop.f32.mrf.mxu0
    %1246 = vdwg.mxu0
    %v1247 = vadd.f32 %v1161, %v1239
    %v1248 = vadd.f32 %v1162, %v1244
    %v1249 = vld [vmem:[#allocation2 + $0x3] sm:$0xff]
    %v1250 = vld [vmem:[#allocation2 + $0xb] sm:$0xff]
    %v1251 = vld [vmem:[%s501] sm:$0xff]
    %v1253 = vsel %vm157, %v1249, 0
    %v1256 = vsel %vm157, %v1250, 0
    %1258 = vmatprep.subr.mxu0 0.0
    %1259 = vmatpush1.msra.mxu0 0.0
    %1260 = vmatprep.subr.mxu0 0.0
    %1261 = vmatpush1.msra.mxu0 0.0
    %1262 = vmatprep.subr.mxu0 0.0
    %1263 = vmatpush1.msra.mxu0 0.0
    %1264 = vmatprep.subr.mxu0 0.0
    %1265 = vmatpush1.msra.mxu0 0.0
    %1266 = vmatprep.subr.mxu0 0.0
    %1267 = vmatpush1.msra.mxu0 0.0
    %1268 = vmatprep.subr.mxu0 0.0
    %1269 = vmatpush1.msra.mxu0 0.0
    %1270 = vmatprep.subr.mxu0 0.0
    %1271 = vmatpush1.msra.mxu0 0.0
    %1272 = vmatprep.subr.mxu0 0.0
    %1273 = vmatpush1.msra.mxu0 0.0
    %1274 = vmatprep.subr.mxu0 0.0
    %1275 = vmatpush1.msra.mxu0 0.0
    %1276 = vmatprep.subr.mxu0 0.0
    %1277 = vmatpush1.msra.mxu0 0.0
    %1278 = vmatprep.subr.mxu0 0.0
    %1279 = vmatpush1.msra.mxu0 0.0
    %1280 = vmatprep.subr.mxu0 0.0
    %1281 = vmatpush1.msra.mxu0 0.0
    %1282 = vmatprep.subr.mxu0 0.0
    %1283 = vmatpush1.msra.mxu0 0.0
    %1284 = vmatprep.subr.mxu0 0.0
    %1285 = vmatpush1.msra.mxu0 0.0
    %1286 = vmatprep.subr.mxu0 0.0
    %1287 = vmatpush1.msra.mxu0 0.0
    %1288 = vmatprep.subr.mxu0 0.0
    %1289 = vmatpush1.msra.mxu0 %v1251
    %1290 = vmatprep.subr.mxu0 0.0
    %1291 = vmatpush2.msra.mxu0 0.0
    %1292 = vmatprep.subr.mxu0 0.0
    %1293 = vmatpush2.msra.mxu0 0.0
    %1294 = vmatprep.subr.mxu0 0.0
    %1295 = vmatpush2.msra.mxu0 0.0
    %1296 = vmatprep.subr.mxu0 0.0
    %1297 = vmatpush2.msra.mxu0 0.0
    %1298 = vmatprep.subr.mxu0 0.0
    %1299 = vmatpush2.msra.mxu0 0.0
    %1300 = vmatprep.subr.mxu0 0.0
    %1301 = vmatpush2.msra.mxu0 0.0
    %1302 = vmatprep.subr.mxu0 0.0
    %1303 = vmatpush2.msra.mxu0 0.0
    %1304 = vmatprep.subr.mxu0 0.0
    %1305 = vmatpush2.msra.mxu0 0.0
    %1306 = vmatprep.subr.mxu0 0.0
    %1307 = vmatpush2.msra.mxu0 0.0
    %1308 = vmatprep.subr.mxu0 0.0
    %1309 = vmatpush2.msra.mxu0 0.0
    %1310 = vmatprep.subr.mxu0 0.0
    %1311 = vmatpush2.msra.mxu0 0.0
    %1312 = vmatprep.subr.mxu0 0.0
    %1313 = vmatpush2.msra.mxu0 0.0
    %1314 = vmatprep.subr.mxu0 0.0
    %1315 = vmatpush2.msra.mxu0 0.0
    %1316 = vmatprep.subr.mxu0 0.0
    %1317 = vmatpush2.msra.mxu0 0.0
    %1318 = vmatprep.subr.mxu0 0.0
    %1319 = vmatpush2.msra.mxu0 0.0
    %1320 = vmatprep.subr.mxu0 0.0
    %1321 = vmatpush2.msra.mxu0 0.0
    %1322 = vmatprep.mubr.f32.mxu0 0.0
    %1323 = vmatmul.mubr.f32.gmra.mxu0 %v1253
    %v1324 = vpop.f32.mrf.mxu0
    %v1325 = vadd.f32 0.0, %v1324
    %v1326 = vpop.f32.mrf.mxu0
    %1327 = vmatprep.mubr.f32.mxu0 0.0
    %1328 = vmatmul.mubr.f32.gmra.mxu0 %v1256
    %v1329 = vpop.f32.mrf.mxu0
    %v1330 = vadd.f32 0.0, %v1329
    %v1331 = vpop.f32.mrf.mxu0
    %1332 = vdwg.mxu0
    %v1333 = vadd.f32 %v1247, %v1325
    %v1334 = vadd.f32 %v1248, %v1330
    %v1335 = vld [vmem:[#allocation2 + $0x4] sm:$0xff]
    %v1336 = vld [vmem:[#allocation2 + $0xc] sm:$0xff]
    %v1337 = vld [vmem:[%s588] sm:$0xff]
    %v1339 = vsel %vm157, %v1335, 0
    %v1342 = vsel %vm157, %v1336, 0
    %1344 = vmatprep.subr.mxu0 0.0
    %1345 = vmatpush1.msra.mxu0 0.0
    %1346 = vmatprep.subr.mxu0 0.0
    %1347 = vmatpush1.msra.mxu0 0.0
    %1348 = vmatprep.subr.mxu0 0.0
    %1349 = vmatpush1.msra.mxu0 0.0
    %1350 = vmatprep.subr.mxu0 0.0
    %1351 = vmatpush1.msra.mxu0 0.0
    %1352 = vmatprep.subr.mxu0 0.0
    %1353 = vmatpush1.msra.mxu0 0.0
    %1354 = vmatprep.subr.mxu0 0.0
    %1355 = vmatpush1.msra.mxu0 0.0
    %1356 = vmatprep.subr.mxu0 0.0
    %1357 = vmatpush1.msra.mxu0 0.0
    %1358 = vmatprep.subr.mxu0 0.0
    %1359 = vmatpush1.msra.mxu0 0.0
    %1360 = vmatprep.subr.mxu0 0.0
    %1361 = vmatpush1.msra.mxu0 0.0
    %1362 = vmatprep.subr.mxu0 0.0
    %1363 = vmatpush1.msra.mxu0 0.0
    %1364 = vmatprep.subr.mxu0 0.0
    %1365 = vmatpush1.msra.mxu0 0.0
    %1366 = vmatprep.subr.mxu0 0.0
    %1367 = vmatpush1.msra.mxu0 0.0
    %1368 = vmatprep.subr.mxu0 0.0
    %1369 = vmatpush1.msra.mxu0 0.0
    %1370 = vmatprep.subr.mxu0 0.0
    %1371 = vmatpush1.msra.mxu0 0.0
    %1372 = vmatprep.subr.mxu0 0.0
    %1373 = vmatpush1.msra.mxu0 0.0
    %1374 = vmatprep.subr.mxu0 0.0
    %1375 = vmatpush1.msra.mxu0 %v1337
    %1376 = vmatprep.subr.mxu0 0.0
    %1377 = vmatpush2.msra.mxu0 0.0
    %1378 = vmatprep.subr.mxu0 0.0
    %1379 = vmatpush2.msra.mxu0 0.0
    %1380 = vmatprep.subr.mxu0 0.0
    %1381 = vmatpush2.msra.mxu0 0.0
    %1382 = vmatprep.subr.mxu0 0.0
    %1383 = vmatpush2.msra.mxu0 0.0
    %1384 = vmatprep.subr.mxu0 0.0
    %1385 = vmatpush2.msra.mxu0 0.0
    %1386 = vmatprep.subr.mxu0 0.0
    %1387 = vmatpush2.msra.mxu0 0.0
    %1388 = vmatprep.subr.mxu0 0.0
    %1389 = vmatpush2.msra.mxu0 0.0
    %1390 = vmatprep.subr.mxu0 0.0
    %1391 = vmatpush2.msra.mxu0 0.0
    %1392 = vmatprep.subr.mxu0 0.0
    %1393 = vmatpush2.msra.mxu0 0.0
    %1394 = vmatprep.subr.mxu0 0.0
    %1395 = vmatpush2.msra.mxu0 0.0
    %1396 = vmatprep.subr.mxu0 0.0
    %1397 = vmatpush2.msra.mxu0 0.0
    %1398 = vmatprep.subr.mxu0 0.0
    %1399 = vmatpush2.msra.mxu0 0.0
    %1400 = vmatprep.subr.mxu0 0.0
    %1401 = vmatpush2.msra.mxu0 0.0
    %1402 = vmatprep.subr.mxu0 0.0
    %1403 = vmatpush2.msra.mxu0 0.0
    %1404 = vmatprep.subr.mxu0 0.0
    %1405 = vmatpush2.msra.mxu0 0.0
    %1406 = vmatprep.subr.mxu0 0.0
    %1407 = vmatpush2.msra.mxu0 0.0
    %1408 = vmatprep.mubr.f32.mxu0 0.0
    %1409 = vmatmul.mubr.f32.gmra.mxu0 %v1339
    %v1410 = vpop.f32.mrf.mxu0
    %v1411 = vadd.f32 0.0, %v1410
    %v1412 = vpop.f32.mrf.mxu0
    %1413 = vmatprep.mubr.f32.mxu0 0.0
    %1414 = vmatmul.mubr.f32.gmra.mxu0 %v1342
    %v1415 = vpop.f32.mrf.mxu0
    %v1416 = vadd.f32 0.0, %v1415
    %v1417 = vpop.f32.mrf.mxu0
    %1418 = vdwg.mxu0
    %v1419 = vadd.f32 %v1333, %v1411
    %v1420 = vadd.f32 %v1334, %v1416
    %v1421 = vsel %vm157, %v1419, 0.0
    %v1422 = vsel %vm157, %v1420, 0.0
    %v1423 = vadd.f32 %v1421, %v1422
    %v1424 = vrot.slane %v1423, 4
    %v1425 = vadd.f32 %v1423, %v1424
    %v1426 = vrot.slane %v1425, 2
    %v1427 = vadd.f32 %v1425, %v1426
    %v1428 = vrot.slane %v1427, 1
    %v1429 = vadd.f32 %v1427, %v1428
    %v1430 = vmul.f32 %v1429, %v167
    %v1431 = vsub.f32 %v1419, %v1430
    %v1432 = vsub.f32 %v1420, %v1430
    %v1433 = vmul.f32 %v1431, %v1431
    %v1434 = vmul.f32 %v1432, %v1432
    %v1435 = vsel %vm157, %v1433, 0.0
    %v1436 = vsel %vm157, %v1434, 0.0
    %v1437 = vadd.f32 %v1435, %v1436
    %v1438 = vrot.slane %v1437, 4
    %v1439 = vadd.f32 %v1437, %v1438
    %v1440 = vrot.slane %v1439, 2
    %v1441 = vadd.f32 %v1439, %v1440
    %v1442 = vrot.slane %v1441, 1
    %v1443 = vadd.f32 %v1441, %v1442
    %v1444 = vmul.f32 %v1443, %v167
    %v1445 = vadd.f32 %v1444, 1e-05
    %v1446 = vrsqrt.pop %v1445
    %v1447 = vmul.f32 %v1431, %v1446
    %v1448 = vmul.f32 %v1432, %v1446
    %v1449 = vmul.f32 %v1447, %v704
    %v1450 = vmul.f32 %v1448, %v704
    %v1451 = vadd.f32 %v1449, %v710
    %v1452 = vadd.f32 %v1450, %v710
    %v1453 = vmin.f32 %v1451, 20.0
    %v1454 = vmin.f32 %v1452, 20.0
    %v1455 = vmul.f32 %v1453, 1.442695
    %v1456 = vpow.pop %v1455
    %v1457 = vmul.f32 %v1454, 1.442695
    %v1458 = vpow.pop %v1457
    %v1459 = vadd.f32 %v1456, 1.0
    %v1460 = vadd.f32 %v1458, 1.0
    %v1461 = vmul.f32 %v1459, %v1459
    %v1462 = vmul.f32 %v1460, %v1460
    %vm1463 = vcmp.gt.f32.partialorder %v1451, 20.0
    %vm1464 = vcmp.gt.f32.partialorder %v1452, 20.0
    %v1465 = vsub.f32 %v1461, 1.0
    %v1466 = vsub.f32 %v1462, 1.0
    %v1467 = vmul.f32 %v1451, %v1465
    %v1468 = vmul.f32 %v1452, %v1466
    %v1469 = vadd.f32 %v1461, 1.0
    %v1470 = vadd.f32 %v1462, 1.0
    %v1471 = vrcp.pop %v1469
    %v1472 = vmul.f32 %v1467, %v1471
    %v1473 = vrcp.pop %v1470
    %v1474 = vmul.f32 %v1468, %v1473
    %v1475 = vsel %vm1463, %v1451, %v1472
    %v1476 = vsel %vm1464, %v1452, %v1474
    %s1477 = scalar_lea.vmem %s0, 16
    %v1478 = vld [vmem:[%s1477] sm:$0xff]
    %v1479 = vld [vmem:[%s1477 + $0x8] sm:$0xff]
    %v1480 = vld [vmem:[#allocation5] sm:$0xf]
    %v1482 = vsel %vm744, %v1478, 0
    %v1485 = vsel %vm744, %v1479, 0
    %v1488 = vsel %vm78, %v1480, 0
    %1490 = vmatprep.subr.mxu0 0.0
    %1491 = vmatpush1.msra.mxu0 0.0
    %1492 = vmatprep.subr.mxu0 0.0
    %1493 = vmatpush1.msra.mxu0 0.0
    %1494 = vmatprep.subr.mxu0 0.0
    %1495 = vmatpush1.msra.mxu0 0.0
    %1496 = vmatprep.subr.mxu0 0.0
    %1497 = vmatpush1.msra.mxu0 0.0
    %1498 = vmatprep.subr.mxu0 0.0
    %1499 = vmatpush1.msra.mxu0 0.0
    %1500 = vmatprep.subr.mxu0 0.0
    %1501 = vmatpush1.msra.mxu0 0.0
    %1502 = vmatprep.subr.mxu0 0.0
    %1503 = vmatpush1.msra.mxu0 0.0
    %1504 = vmatprep.subr.mxu0 0.0
    %1505 = vmatpush1.msra.mxu0 0.0
    %1506 = vmatprep.subr.mxu0 0.0
    %1507 = vmatpush1.msra.mxu0 0.0
    %1508 = vmatprep.subr.mxu0 0.0
    %1509 = vmatpush1.msra.mxu0 0.0
    %1510 = vmatprep.subr.mxu0 0.0
    %1511 = vmatpush1.msra.mxu0 0.0
    %1512 = vmatprep.subr.mxu0 0.0
    %1513 = vmatpush1.msra.mxu0 0.0
    %1514 = vmatprep.subr.mxu0 0.0
    %1515 = vmatpush1.msra.mxu0 0.0
    %1516 = vmatprep.subr.mxu0 0.0
    %1517 = vmatpush1.msra.mxu0 0.0
    %1518 = vmatprep.subr.mxu0 0.0
    %1519 = vmatpush1.msra.mxu0 0.0
    %1520 = vmatprep.subr.mxu0 0.0
    %1521 = vmatpush1.msra.mxu0 %v1488
    %1522 = vmatprep.subr.mxu0 0.0
    %1523 = vmatpush2.msra.mxu0 0.0
    %1524 = vmatprep.subr.mxu0 0.0
    %1525 = vmatpush2.msra.mxu0 0.0
    %1526 = vmatprep.subr.mxu0 0.0
    %1527 = vmatpush2.msra.mxu0 0.0
    %1528 = vmatprep.subr.mxu0 0.0
    %1529 = vmatpush2.msra.mxu0 0.0
    %1530 = vmatprep.subr.mxu0 0.0
    %1531 = vmatpush2.msra.mxu0 0.0
    %1532 = vmatprep.subr.mxu0 0.0
    %1533 = vmatpush2.msra.mxu0 0.0
    %1534 = vmatprep.subr.mxu0 0.0
    %1535 = vmatpush2.msra.mxu0 0.0
    %1536 = vmatprep.subr.mxu0 0.0
    %1537 = vmatpush2.msra.mxu0 0.0
    %1538 = vmatprep.subr.mxu0 0.0
    %1539 = vmatpush2.msra.mxu0 0.0
    %1540 = vmatprep.subr.mxu0 0.0
    %1541 = vmatpush2.msra.mxu0 0.0
    %1542 = vmatprep.subr.mxu0 0.0
    %1543 = vmatpush2.msra.mxu0 0.0
    %1544 = vmatprep.subr.mxu0 0.0
    %1545 = vmatpush2.msra.mxu0 0.0
    %1546 = vmatprep.subr.mxu0 0.0
    %1547 = vmatpush2.msra.mxu0 0.0
    %1548 = vmatprep.subr.mxu0 0.0
    %1549 = vmatpush2.msra.mxu0 0.0
    %1550 = vmatprep.subr.mxu0 0.0
    %1551 = vmatpush2.msra.mxu0 0.0
    %1552 = vmatprep.subr.mxu0 0.0
    %1553 = vmatpush2.msra.mxu0 0.0
    %1554 = vmatprep.mubr.f32.mxu0 0.0
    %1555 = vmatmul.mubr.f32.gmra.mxu0 %v1482
    %v1556 = vpop.f32.mrf.mxu0
    %v1557 = vadd.f32 %v743, %v1556
    %v1558 = vpop.f32.mrf.mxu0
    %1559 = vmatprep.mubr.f32.mxu0 0.0
    %1560 = vmatmul.mubr.f32.gmra.mxu0 %v1485
    %v1561 = vpop.f32.mrf.mxu0
    %v1562 = vadd.f32 %v743, %v1561
    %v1563 = vpop.f32.mrf.mxu0
    %1564 = vdwg.mxu0
    %v1565 = vadd.f32 %v1475, %v1557
    %v1566 = vadd.f32 %v1476, %v1562
    %s1567 = scalar_lea.vmem %s7, 16
    %1568 = vst.msk [vmem:[%s1567] sm:$0xff] %vm157, %v1565
    %1569 = vst.msk [vmem:[%s1567 + $0x8] sm:$0xff] %vm157, %v1566
    // Predicated region
    $region38: #{tpu_custom_call.1} parent=1 // pred_check
      _
    $region39: #{tpu_custom_call.1} parent=1 // pred_check_branch
      %1571 = sbr.rel (0) target = $region41
    $region40: #{tpu_custom_call.1} parent=1 // pred_region
      _
    $region41: #{tpu_custom_call.1} parent=1 // pred_fallthru
      _
    // Predicated region
    $region42: #{tpu_custom_call.1} parent=1 // pred_check
      _
    $region43: #{tpu_custom_call.1} parent=1 // pred_check_branch
      %1573 = sbr.rel (0) target = $region45
    $region44: #{tpu_custom_call.1} parent=1 // pred_region
      _
    $region45: #{tpu_custom_call.1} parent=1 // pred_fallthru
      _
    %1574 = vsyncpa [#allocation4], 1
    %1575 = vsyncpa [#allocation6], 1

</llo_original>
